<compile_context>
chip_gen: v7x
topology: tpu7x:2x2x1
jax: 0.10.0
libtpu: 0.0.40
codegen_flags: <defaults>
</compile_context>

<pallas_src>
import numpy as np

import jax
import jax.numpy as jnp
from jax import lax
from jax.experimental import pallas as pl
from jax.experimental.pallas import tpu as pltpu


# ----------------------------- kernel ----------------------------------------


def basic_block_kernel(x_ref, w1_ref, w2_ref, s1_ref, b1_ref, s2_ref, b2_ref,
                       mask_ref, o_ref, p1_ref, p2_ref, slab_ref):
    """Fused conv1+bn1+relu -> conv2+bn2+residual+relu for one image (NCHW)."""
    _, C, H, W = x_ref.shape
    Wp = W + 2                 # padded row width
    Lout = H * Wp              # flattened length of the computed output slab
    J0 = Wp + 1                # flat index of padded-grid position (1, 1)

    # ---- build the zero-padded conv1 input in VMEM (flattened padded grid) --
    p1_ref[...] = jnp.zeros_like(p1_ref)
    for h in range(H):
        dst = (h + 1) * Wp + 1
        p1_ref[:, dst:dst + W] = x_ref[0, :, h, :]

    # relative flat offsets of the 9 conv taps around an interior position
    offs = [(ky - 1) * Wp + (kx - 1) for ky in range(3) for kx in range(3)]

    def conv3x3(p_ref, w_ref):
        # im2col slab: 9 lane-shifted views of the padded image stacked on the
        # sublane axis -> one (C, 9*C) @ (9*C, Lout) MXU matmul.
        for t, off in enumerate(offs):
            src = J0 + off
            slab_ref[t * C:(t + 1) * C, :] = p_ref[:, src:src + Lout]
        return jnp.dot(w_ref[...], slab_ref[...],
                       preferred_element_type=jnp.float32)

    mask = mask_ref[...]                       # (1, Lout): 1.0 on real columns

    # ---- conv1 + bn1 + relu -------------------------------------------------
    a1 = conv3x3(p1_ref, w1_ref)
    a1 = jnp.maximum(a1 * s1_ref[...] + b1_ref[...], 0.0)

    # ---- write act1 into the zero-padded conv2 input (pad columns zeroed) ---
    p2_ref[...] = jnp.zeros_like(p2_ref)
    p2_ref[:, J0:J0 + Lout] = a1 * mask

    # ---- conv2 + bn2 + residual add + relu ----------------------------------
    a2 = conv3x3(p2_ref, w2_ref)
    res = p1_ref[:, J0:J0 + Lout]              # x (zeros on the pad columns)
    out = jnp.maximum(a2 * s2_ref[...] + b2_ref[...] + res, 0.0)
    o_ref[0] = out.astype(o_ref.dtype)


# ----------------------------- wrapper ----------------------------------------


@jax.jit
def basic_block_forward(x_nchw, w1_2d, w2_2d, scale1, shift1, scale2, shift2):
    """BasicBlock forward. x_nchw: (N, C, H, W). Returns (N, C, H, W)."""
    N, C, H, W = x_nchw.shape
    Wp = W + 2
    Lout = H * Wp
    Lpad = (H + 2) * Wp + 8        # flattened padded grid + slack for tap reads

    # Lane mask: within each padded row only the first W of Wp columns are real
    # output positions (compile-time constant).
    col_mask = jnp.asarray(
        ((np.arange(Lout) % Wp) < W).astype(np.float32).reshape(1, Lout))

    out_flat = pl.pallas_call(
        basic_block_kernel,
        out_shape=jax.ShapeDtypeStruct((N, C, Lout), jnp.float32),
        grid=(N,),
        in_specs=[
            pl.BlockSpec((1, C, H, W), lambda n: (n, 0, 0, 0)),   # x
            pl.BlockSpec((C, 9 * C), lambda n: (0, 0)),           # w1 (folded)
            pl.BlockSpec((C, 9 * C), lambda n: (0, 0)),           # w2 (folded)
            pl.BlockSpec((C, 1), lambda n: (0, 0)),               # bn1 scale
            pl.BlockSpec((C, 1), lambda n: (0, 0)),               # bn1 shift
            pl.BlockSpec((C, 1), lambda n: (0, 0)),               # bn2 scale
            pl.BlockSpec((C, 1), lambda n: (0, 0)),               # bn2 shift
            pl.BlockSpec((1, Lout), lambda n: (0, 0)),            # column mask
        ],
        out_specs=pl.BlockSpec((1, C, Lout), lambda n: (n, 0, 0)),
        scratch_shapes=[
            pltpu.VMEM((C, Lpad), jnp.float32),      # zero-padded conv1 input
            pltpu.VMEM((C, Lpad), jnp.float32),      # zero-padded conv2 input
            pltpu.VMEM((9 * C, Lout), jnp.float32),  # im2col slab
        ],
        compiler_params=pltpu.CompilerParams(
            dimension_semantics=("parallel",)),
    )(x_nchw, w1_2d, w2_2d, scale1, shift1, scale2, shift2, col_mask)

    # (N, C, H*(W+2)) -> (N, C, H, W+2) -> drop the 2 junk columns per row.
    return out_flat.reshape(N, C, H, Wp)[:, :, :, :W]


# ----------------------------- params / reference ----------------------------


def fold_conv_weight(w_oihw):
    """(Cout, Cin, 3, 3) -> (Cout, 9*Cin), column index = (ky*3+kx)*Cin + ci."""
    cout, cin, kh, kw = w_oihw.shape
    return jnp.transpose(w_oihw, (2, 3, 1, 0)).reshape(kh * kw * cin, cout).T


def make_params(key, inplanes, planes):
    assert inplanes == planes, "downsample=None requires inplanes == planes"
    ks = jax.random.split(key, 10)
    eps = 1e-5
    # PyTorch conv weight layout (out, in, kh, kw), bias=False.
    w1 = jax.random.normal(ks[0], (planes, inplanes, 3, 3), jnp.float32) * 0.1
    w2 = jax.random.normal(ks[1], (planes, planes, 3, 3), jnp.float32) * 0.1

    def bn(kg, kb, km, kv, c):
        gamma = jax.random.uniform(kg, (c,), jnp.float32, 0.5, 1.5)
        beta = jax.random.normal(kb, (c,), jnp.float32) * 0.1
        mean = jax.random.normal(km, (c,), jnp.float32) * 0.1
        var = jax.random.uniform(kv, (c,), jnp.float32, 0.5, 1.5)
        scale = gamma / jnp.sqrt(var + eps)
        shift = beta - mean * scale
        return scale, shift

    scale1, shift1 = bn(ks[2], ks[3], ks[4], ks[5], planes)
    scale2, shift2 = bn(ks[6], ks[7], ks[8], ks[9], planes)
    return w1, w2, scale1, shift1, scale2, shift2


def reference_forward(x, w1_oihw, w2_oihw, scale1, shift1, scale2, shift2):
    """Pure-XLA reference with identical semantics (NCHW end to end)."""
    dn = ("NCHW", "OIHW", "NCHW")
    s1 = scale1.reshape(1, -1, 1, 1); b1 = shift1.reshape(1, -1, 1, 1)
    s2 = scale2.reshape(1, -1, 1, 1); b2 = shift2.reshape(1, -1, 1, 1)
    o = lax.conv_general_dilated(x, w1_oihw, (1, 1), "SAME",
                                 dimension_numbers=dn)
    o = jnp.maximum(o * s1 + b1, 0.0)
    o = lax.conv_general_dilated(o, w2_oihw, (1, 1), "SAME",
                                 dimension_numbers=dn)
    o = jnp.maximum(o * s2 + b2 + x, 0.0)
    return o


# ----------------------------- main -------------------------------------------


if __name__ == "__main__":
    key = jax.random.PRNGKey(0)
    kx, kp = jax.random.split(key)

    N, C, H, W = 2, 8, 16, 16  # inplanes = planes = 8
    x = jax.random.normal(kx, (N, C, H, W), jnp.float32)
    w1, w2, scale1, shift1, scale2, shift2 = make_params(kp, C, C)

    out = basic_block_forward(
        x, fold_conv_weight(w1), fold_conv_weight(w2),
        scale1.reshape(C, 1), shift1.reshape(C, 1),
        scale2.reshape(C, 1), shift2.reshape(C, 1))
    out = jax.block_until_ready(out)

    ref = reference_forward(x, w1, w2, scale1, shift1, scale2, shift2)
    assert out.shape == (N, C, H, W)
    max_err = float(jnp.max(jnp.abs(out - ref)))
    assert jnp.allclose(out, ref, atol=1e-4, rtol=1e-4), max_err

    print("KERNEL_OK")
</pallas_src>

<mosaic_0001>
module attributes {stable_mosaic.version = 11 : i64} {
  func.func @basic_block_kernel(%arg0: i32, %arg1: memref<1x8x16x16xf32, #tpu.memory_space<vmem>>, %arg2: memref<8x72xf32, #tpu.memory_space<vmem>>, %arg3: memref<8x72xf32, #tpu.memory_space<vmem>>, %arg4: memref<8x1xf32, #tpu.memory_space<vmem>>, %arg5: memref<8x1xf32, #tpu.memory_space<vmem>>, %arg6: memref<8x1xf32, #tpu.memory_space<vmem>>, %arg7: memref<8x1xf32, #tpu.memory_space<vmem>>, %arg8: memref<1x288xf32, #tpu.memory_space<vmem>>, %arg9: memref<1x8x288xf32, #tpu.memory_space<vmem>>, %arg10: memref<8x332xf32, #tpu.memory_space<vmem>>, %arg11: memref<8x332xf32, #tpu.memory_space<vmem>>, %arg12: memref<72x288xf32, #tpu.memory_space<vmem>>) attributes {dimension_semantics = [#tpu.dimension_semantics<parallel>], iteration_bounds = array<i64: 2>, scalar_prefetch = 0 : i64, scratch_operands = 3 : i64, tpu.core_type = #tpu.core_type<tc>, window_params = [{transform_indices = @transform_0, window_bounds = array<i64: 1, 8, 16, 16>}, {pipeline_mode = #tpu.pipeline_mode<synchronous>, transform_indices = @transform_1, window_bounds = array<i64: 8, 72>}, {pipeline_mode = #tpu.pipeline_mode<synchronous>, transform_indices = @transform_2, window_bounds = array<i64: 8, 72>}, {pipeline_mode = #tpu.pipeline_mode<synchronous>, transform_indices = @transform_3, window_bounds = array<i64: 8, 1>}, {pipeline_mode = #tpu.pipeline_mode<synchronous>, transform_indices = @transform_4, window_bounds = array<i64: 8, 1>}, {pipeline_mode = #tpu.pipeline_mode<synchronous>, transform_indices = @transform_5, window_bounds = array<i64: 8, 1>}, {pipeline_mode = #tpu.pipeline_mode<synchronous>, transform_indices = @transform_6, window_bounds = array<i64: 8, 1>}, {pipeline_mode = #tpu.pipeline_mode<synchronous>, transform_indices = @transform_7, window_bounds = array<i64: 1, 288>}, {transform_indices = @transform_8, window_bounds = array<i64: 1, 8, 288>}]} {
    %cst = arith.constant 0.000000e+00 : f32
    %0 = vector.broadcast %cst : f32 to vector<8x332xf32>
    %c0 = arith.constant 0 : index
    %c0_0 = arith.constant 0 : index
    %1 = vector.load %arg10[%c0, %c0_0] : memref<8x332xf32, #tpu.memory_space<vmem>>, vector<8x332xf32>
    tpu.vector_store %arg10[%c0, %c0_0], %0 {strides = array<i32>} : memref<8x332xf32, #tpu.memory_space<vmem>>, vector<8x332xf32>,
    %c0_1 = arith.constant 0 : index
    %c0_2 = arith.constant 0 : index
    %c0_3 = arith.constant 0 : index
    %c0_4 = arith.constant 0 : index
    %2 = vector.load %arg1[%c0_1, %c0_2, %c0_3, %c0_4] : memref<1x8x16x16xf32, #tpu.memory_space<vmem>>, vector<1x8x1x16xf32>
    %3 = vector.shape_cast %2 : vector<1x8x1x16xf32> to vector<8x16xf32>
    %c0_5 = arith.constant 0 : index
    %c19 = arith.constant 19 : index
    %4 = vector.load %arg10[%c0_5, %c19] : memref<8x332xf32, #tpu.memory_space<vmem>>, vector<8x16xf32>
    tpu.vector_store %arg10[%c0_5, %c19], %3 {strides = array<i32>} : memref<8x332xf32, #tpu.memory_space<vmem>>, vector<8x16xf32>,
    %c0_6 = arith.constant 0 : index
    %c0_7 = arith.constant 0 : index
    %c1 = arith.constant 1 : index
    %c0_8 = arith.constant 0 : index
    %5 = vector.load %arg1[%c0_6, %c0_7, %c1, %c0_8] : memref<1x8x16x16xf32, #tpu.memory_space<vmem>>, vector<1x8x1x16xf32>
    %6 = vector.shape_cast %5 : vector<1x8x1x16xf32> to vector<8x16xf32>
    %c0_9 = arith.constant 0 : index
    %c37 = arith.constant 37 : index
    %7 = vector.load %arg10[%c0_9, %c37] : memref<8x332xf32, #tpu.memory_space<vmem>>, vector<8x16xf32>
    tpu.vector_store %arg10[%c0_9, %c37], %6 {strides = array<i32>} : memref<8x332xf32, #tpu.memory_space<vmem>>, vector<8x16xf32>,
    %c0_10 = arith.constant 0 : index
    %c0_11 = arith.constant 0 : index
    %c2 = arith.constant 2 : index
    %c0_12 = arith.constant 0 : index
    %8 = vector.load %arg1[%c0_10, %c0_11, %c2, %c0_12] : memref<1x8x16x16xf32, #tpu.memory_space<vmem>>, vector<1x8x1x16xf32>
    %9 = vector.shape_cast %8 : vector<1x8x1x16xf32> to vector<8x16xf32>
    %c0_13 = arith.constant 0 : index
    %c55 = arith.constant 55 : index
    %10 = vector.load %arg10[%c0_13, %c55] : memref<8x332xf32, #tpu.memory_space<vmem>>, vector<8x16xf32>
    tpu.vector_store %arg10[%c0_13, %c55], %9 {strides = array<i32>} : memref<8x332xf32, #tpu.memory_space<vmem>>, vector<8x16xf32>,
    %c0_14 = arith.constant 0 : index
    %c0_15 = arith.constant 0 : index
    %c3 = arith.constant 3 : index
    %c0_16 = arith.constant 0 : index
    %11 = vector.load %arg1[%c0_14, %c0_15, %c3, %c0_16] : memref<1x8x16x16xf32, #tpu.memory_space<vmem>>, vector<1x8x1x16xf32>
    %12 = vector.shape_cast %11 : vector<1x8x1x16xf32> to vector<8x16xf32>
    %c0_17 = arith.constant 0 : index
    %c73 = arith.constant 73 : index
    %13 = vector.load %arg10[%c0_17, %c73] : memref<8x332xf32, #tpu.memory_space<vmem>>, vector<8x16xf32>
    tpu.vector_store %arg10[%c0_17, %c73], %12 {strides = array<i32>} : memref<8x332xf32, #tpu.memory_space<vmem>>, vector<8x16xf32>,
    %c0_18 = arith.constant 0 : index
    %c0_19 = arith.constant 0 : index
    %c4 = arith.constant 4 : index
    %c0_20 = arith.constant 0 : index
    %14 = vector.load %arg1[%c0_18, %c0_19, %c4, %c0_20] : memref<1x8x16x16xf32, #tpu.memory_space<vmem>>, vector<1x8x1x16xf32>
    %15 = vector.shape_cast %14 : vector<1x8x1x16xf32> to vector<8x16xf32>
    %c0_21 = arith.constant 0 : index
    %c91 = arith.constant 91 : index
    %16 = vector.load %arg10[%c0_21, %c91] : memref<8x332xf32, #tpu.memory_space<vmem>>, vector<8x16xf32>
    tpu.vector_store %arg10[%c0_21, %c91], %15 {strides = array<i32>} : memref<8x332xf32, #tpu.memory_space<vmem>>, vector<8x16xf32>,
    %c0_22 = arith.constant 0 : index
    %c0_23 = arith.constant 0 : index
    %c5 = arith.constant 5 : index
    %c0_24 = arith.constant 0 : index
    %17 = vector.load %arg1[%c0_22, %c0_23, %c5, %c0_24] : memref<1x8x16x16xf32, #tpu.memory_space<vmem>>, vector<1x8x1x16xf32>
    %18 = vector.shape_cast %17 : vector<1x8x1x16xf32> to vector<8x16xf32>
    %c0_25 = arith.constant 0 : index
    %c109 = arith.constant 109 : index
    %19 = vector.load %arg10[%c0_25, %c109] : memref<8x332xf32, #tpu.memory_space<vmem>>, vector<8x16xf32>
    tpu.vector_store %arg10[%c0_25, %c109], %18 {strides = array<i32>} : memref<8x332xf32, #tpu.memory_space<vmem>>, vector<8x16xf32>,
    %c0_26 = arith.constant 0 : index
    %c0_27 = arith.constant 0 : index
    %c6 = arith.constant 6 : index
    %c0_28 = arith.constant 0 : index
    %20 = vector.load %arg1[%c0_26, %c0_27, %c6, %c0_28] : memref<1x8x16x16xf32, #tpu.memory_space<vmem>>, vector<1x8x1x16xf32>
    %21 = vector.shape_cast %20 : vector<1x8x1x16xf32> to vector<8x16xf32>
    %c0_29 = arith.constant 0 : index
    %c127 = arith.constant 127 : index
    %22 = vector.load %arg10[%c0_29, %c127] : memref<8x332xf32, #tpu.memory_space<vmem>>, vector<8x16xf32>
    tpu.vector_store %arg10[%c0_29, %c127], %21 {strides = array<i32>} : memref<8x332xf32, #tpu.memory_space<vmem>>, vector<8x16xf32>,
    %c0_30 = arith.constant 0 : index
    %c0_31 = arith.constant 0 : index
    %c7 = arith.constant 7 : index
    %c0_32 = arith.constant 0 : index
    %23 = vector.load %arg1[%c0_30, %c0_31, %c7, %c0_32] : memref<1x8x16x16xf32, #tpu.memory_space<vmem>>, vector<1x8x1x16xf32>
    %24 = vector.shape_cast %23 : vector<1x8x1x16xf32> to vector<8x16xf32>
    %c0_33 = arith.constant 0 : index
    %c145 = arith.constant 145 : index
    %25 = vector.load %arg10[%c0_33, %c145] : memref<8x332xf32, #tpu.memory_space<vmem>>, vector<8x16xf32>
    tpu.vector_store %arg10[%c0_33, %c145], %24 {strides = array<i32>} : memref<8x332xf32, #tpu.memory_space<vmem>>, vector<8x16xf32>,
    %c0_34 = arith.constant 0 : index
    %c0_35 = arith.constant 0 : index
    %c8 = arith.constant 8 : index
    %c0_36 = arith.constant 0 : index
    %26 = vector.load %arg1[%c0_34, %c0_35, %c8, %c0_36] : memref<1x8x16x16xf32, #tpu.memory_space<vmem>>, vector<1x8x1x16xf32>
    %27 = vector.shape_cast %26 : vector<1x8x1x16xf32> to vector<8x16xf32>
    %c0_37 = arith.constant 0 : index
    %c163 = arith.constant 163 : index
    %28 = vector.load %arg10[%c0_37, %c163] : memref<8x332xf32, #tpu.memory_space<vmem>>, vector<8x16xf32>
    tpu.vector_store %arg10[%c0_37, %c163], %27 {strides = array<i32>} : memref<8x332xf32, #tpu.memory_space<vmem>>, vector<8x16xf32>,
    %c0_38 = arith.constant 0 : index
    %c0_39 = arith.constant 0 : index
    %c9 = arith.constant 9 : index
    %c0_40 = arith.constant 0 : index
    %29 = vector.load %arg1[%c0_38, %c0_39, %c9, %c0_40] : memref<1x8x16x16xf32, #tpu.memory_space<vmem>>, vector<1x8x1x16xf32>
    %30 = vector.shape_cast %29 : vector<1x8x1x16xf32> to vector<8x16xf32>
    %c0_41 = arith.constant 0 : index
    %c181 = arith.constant 181 : index
    %31 = vector.load %arg10[%c0_41, %c181] : memref<8x332xf32, #tpu.memory_space<vmem>>, vector<8x16xf32>
    tpu.vector_store %arg10[%c0_41, %c181], %30 {strides = array<i32>} : memref<8x332xf32, #tpu.memory_space<vmem>>, vector<8x16xf32>,
    %c0_42 = arith.constant 0 : index
    %c0_43 = arith.constant 0 : index
    %c10 = arith.constant 10 : index
    %c0_44 = arith.constant 0 : index
    %32 = vector.load %arg1[%c0_42, %c0_43, %c10, %c0_44] : memref<1x8x16x16xf32, #tpu.memory_space<vmem>>, vector<1x8x1x16xf32>
    %33 = vector.shape_cast %32 : vector<1x8x1x16xf32> to vector<8x16xf32>
    %c0_45 = arith.constant 0 : index
    %c199 = arith.constant 199 : index
    %34 = vector.load %arg10[%c0_45, %c199] : memref<8x332xf32, #tpu.memory_space<vmem>>, vector<8x16xf32>
    tpu.vector_store %arg10[%c0_45, %c199], %33 {strides = array<i32>} : memref<8x332xf32, #tpu.memory_space<vmem>>, vector<8x16xf32>,
    %c0_46 = arith.constant 0 : index
    %c0_47 = arith.constant 0 : index
    %c11 = arith.constant 11 : index
    %c0_48 = arith.constant 0 : index
    %35 = vector.load %arg1[%c0_46, %c0_47, %c11, %c0_48] : memref<1x8x16x16xf32, #tpu.memory_space<vmem>>, vector<1x8x1x16xf32>
    %36 = vector.shape_cast %35 : vector<1x8x1x16xf32> to vector<8x16xf32>
    %c0_49 = arith.constant 0 : index
    %c217 = arith.constant 217 : index
    %37 = vector.load %arg10[%c0_49, %c217] : memref<8x332xf32, #tpu.memory_space<vmem>>, vector<8x16xf32>
    tpu.vector_store %arg10[%c0_49, %c217], %36 {strides = array<i32>} : memref<8x332xf32, #tpu.memory_space<vmem>>, vector<8x16xf32>,
    %c0_50 = arith.constant 0 : index
    %c0_51 = arith.constant 0 : index
    %c12 = arith.constant 12 : index
    %c0_52 = arith.constant 0 : index
    %38 = vector.load %arg1[%c0_50, %c0_51, %c12, %c0_52] : memref<1x8x16x16xf32, #tpu.memory_space<vmem>>, vector<1x8x1x16xf32>
    %39 = vector.shape_cast %38 : vector<1x8x1x16xf32> to vector<8x16xf32>
    %c0_53 = arith.constant 0 : index
    %c235 = arith.constant 235 : index
    %40 = vector.load %arg10[%c0_53, %c235] : memref<8x332xf32, #tpu.memory_space<vmem>>, vector<8x16xf32>
    tpu.vector_store %arg10[%c0_53, %c235], %39 {strides = array<i32>} : memref<8x332xf32, #tpu.memory_space<vmem>>, vector<8x16xf32>,
    %c0_54 = arith.constant 0 : index
    %c0_55 = arith.constant 0 : index
    %c13 = arith.constant 13 : index
    %c0_56 = arith.constant 0 : index
    %41 = vector.load %arg1[%c0_54, %c0_55, %c13, %c0_56] : memref<1x8x16x16xf32, #tpu.memory_space<vmem>>, vector<1x8x1x16xf32>
    %42 = vector.shape_cast %41 : vector<1x8x1x16xf32> to vector<8x16xf32>
    %c0_57 = arith.constant 0 : index
    %c253 = arith.constant 253 : index
    %43 = vector.load %arg10[%c0_57, %c253] : memref<8x332xf32, #tpu.memory_space<vmem>>, vector<8x16xf32>
    tpu.vector_store %arg10[%c0_57, %c253], %42 {strides = array<i32>} : memref<8x332xf32, #tpu.memory_space<vmem>>, vector<8x16xf32>,
    %c0_58 = arith.constant 0 : index
    %c0_59 = arith.constant 0 : index
    %c14 = arith.constant 14 : index
    %c0_60 = arith.constant 0 : index
    %44 = vector.load %arg1[%c0_58, %c0_59, %c14, %c0_60] : memref<1x8x16x16xf32, #tpu.memory_space<vmem>>, vector<1x8x1x16xf32>
    %45 = vector.shape_cast %44 : vector<1x8x1x16xf32> to vector<8x16xf32>
    %c0_61 = arith.constant 0 : index
    %c271 = arith.constant 271 : index
    %46 = vector.load %arg10[%c0_61, %c271] : memref<8x332xf32, #tpu.memory_space<vmem>>, vector<8x16xf32>
    tpu.vector_store %arg10[%c0_61, %c271], %45 {strides = array<i32>} : memref<8x332xf32, #tpu.memory_space<vmem>>, vector<8x16xf32>,
    %c0_62 = arith.constant 0 : index
    %c0_63 = arith.constant 0 : index
    %c15 = arith.constant 15 : index
    %c0_64 = arith.constant 0 : index
    %47 = vector.load %arg1[%c0_62, %c0_63, %c15, %c0_64] : memref<1x8x16x16xf32, #tpu.memory_space<vmem>>, vector<1x8x1x16xf32>
    %48 = vector.shape_cast %47 : vector<1x8x1x16xf32> to vector<8x16xf32>
    %c0_65 = arith.constant 0 : index
    %c289 = arith.constant 289 : index
    %49 = vector.load %arg10[%c0_65, %c289] : memref<8x332xf32, #tpu.memory_space<vmem>>, vector<8x16xf32>
    tpu.vector_store %arg10[%c0_65, %c289], %48 {strides = array<i32>} : memref<8x332xf32, #tpu.memory_space<vmem>>, vector<8x16xf32>,
    %c0_66 = arith.constant 0 : index
    %c0_67 = arith.constant 0 : index
    %50 = vector.load %arg8[%c0_66, %c0_67] : memref<1x288xf32, #tpu.memory_space<vmem>>, vector<1x288xf32>
    %c0_68 = arith.constant 0 : index
    %c0_69 = arith.constant 0 : index
    %51 = vector.load %arg10[%c0_68, %c0_69] : memref<8x332xf32, #tpu.memory_space<vmem>>, vector<8x288xf32>
    %c0_70 = arith.constant 0 : index
    %c0_71 = arith.constant 0 : index
    %52 = vector.load %arg12[%c0_70, %c0_71] : memref<72x288xf32, #tpu.memory_space<vmem>>, vector<8x288xf32>
    tpu.vector_store %arg12[%c0_70, %c0_71], %51 {strides = array<i32>} : memref<72x288xf32, #tpu.memory_space<vmem>>, vector<8x288xf32>,
    %c0_72 = arith.constant 0 : index
    %c1_73 = arith.constant 1 : index
    %53 = vector.load %arg10[%c0_72, %c1_73] : memref<8x332xf32, #tpu.memory_space<vmem>>, vector<8x288xf32>
    %c8_74 = arith.constant 8 : index
    %c0_75 = arith.constant 0 : index
    %54 = vector.load %arg12[%c8_74, %c0_75] : memref<72x288xf32, #tpu.memory_space<vmem>>, vector<8x288xf32>
    tpu.vector_store %arg12[%c8_74, %c0_75], %53 {strides = array<i32>} : memref<72x288xf32, #tpu.memory_space<vmem>>, vector<8x288xf32>,
    %c0_76 = arith.constant 0 : index
    %c2_77 = arith.constant 2 : index
    %55 = vector.load %arg10[%c0_76, %c2_77] : memref<8x332xf32, #tpu.memory_space<vmem>>, vector<8x288xf32>
    %c16 = arith.constant 16 : index
    %c0_78 = arith.constant 0 : index
    %56 = vector.load %arg12[%c16, %c0_78] : memref<72x288xf32, #tpu.memory_space<vmem>>, vector<8x288xf32>
    tpu.vector_store %arg12[%c16, %c0_78], %55 {strides = array<i32>} : memref<72x288xf32, #tpu.memory_space<vmem>>, vector<8x288xf32>,
    %c0_79 = arith.constant 0 : index
    %c18 = arith.constant 18 : index
    %57 = vector.load %arg10[%c0_79, %c18] : memref<8x332xf32, #tpu.memory_space<vmem>>, vector<8x288xf32>
    %c24 = arith.constant 24 : index
    %c0_80 = arith.constant 0 : index
    %58 = vector.load %arg12[%c24, %c0_80] : memref<72x288xf32, #tpu.memory_space<vmem>>, vector<8x288xf32>
    tpu.vector_store %arg12[%c24, %c0_80], %57 {strides = array<i32>} : memref<72x288xf32, #tpu.memory_space<vmem>>, vector<8x288xf32>,
    %c0_81 = arith.constant 0 : index
    %c19_82 = arith.constant 19 : index
    %59 = vector.load %arg10[%c0_81, %c19_82] : memref<8x332xf32, #tpu.memory_space<vmem>>, vector<8x288xf32>
    %c32 = arith.constant 32 : index
    %c0_83 = arith.constant 0 : index
    %60 = vector.load %arg12[%c32, %c0_83] : memref<72x288xf32, #tpu.memory_space<vmem>>, vector<8x288xf32>
    tpu.vector_store %arg12[%c32, %c0_83], %59 {strides = array<i32>} : memref<72x288xf32, #tpu.memory_space<vmem>>, vector<8x288xf32>,
    %c0_84 = arith.constant 0 : index
    %c20 = arith.constant 20 : index
    %61 = vector.load %arg10[%c0_84, %c20] : memref<8x332xf32, #tpu.memory_space<vmem>>, vector<8x288xf32>
    %c40 = arith.constant 40 : index
    %c0_85 = arith.constant 0 : index
    %62 = vector.load %arg12[%c40, %c0_85] : memref<72x288xf32, #tpu.memory_space<vmem>>, vector<8x288xf32>
    tpu.vector_store %arg12[%c40, %c0_85], %61 {strides = array<i32>} : memref<72x288xf32, #tpu.memory_space<vmem>>, vector<8x288xf32>,
    %c0_86 = arith.constant 0 : index
    %c36 = arith.constant 36 : index
    %63 = vector.load %arg10[%c0_86, %c36] : memref<8x332xf32, #tpu.memory_space<vmem>>, vector<8x288xf32>
    %c48 = arith.constant 48 : index
    %c0_87 = arith.constant 0 : index
    %64 = vector.load %arg12[%c48, %c0_87] : memref<72x288xf32, #tpu.memory_space<vmem>>, vector<8x288xf32>
    tpu.vector_store %arg12[%c48, %c0_87], %63 {strides = array<i32>} : memref<72x288xf32, #tpu.memory_space<vmem>>, vector<8x288xf32>,
    %c0_88 = arith.constant 0 : index
    %c37_89 = arith.constant 37 : index
    %65 = vector.load %arg10[%c0_88, %c37_89] : memref<8x332xf32, #tpu.memory_space<vmem>>, vector<8x288xf32>
    %c56 = arith.constant 56 : index
    %c0_90 = arith.constant 0 : index
    %66 = vector.load %arg12[%c56, %c0_90] : memref<72x288xf32, #tpu.memory_space<vmem>>, vector<8x288xf32>
    tpu.vector_store %arg12[%c56, %c0_90], %65 {strides = array<i32>} : memref<72x288xf32, #tpu.memory_space<vmem>>, vector<8x288xf32>,
    %c0_91 = arith.constant 0 : index
    %c38 = arith.constant 38 : index
    %67 = vector.load %arg10[%c0_91, %c38] : memref<8x332xf32, #tpu.memory_space<vmem>>, vector<8x288xf32>
    %c64 = arith.constant 64 : index
    %c0_92 = arith.constant 0 : index
    %68 = vector.load %arg12[%c64, %c0_92] : memref<72x288xf32, #tpu.memory_space<vmem>>, vector<8x288xf32>
    tpu.vector_store %arg12[%c64, %c0_92], %67 {strides = array<i32>} : memref<72x288xf32, #tpu.memory_space<vmem>>, vector<8x288xf32>,
    %c0_93 = arith.constant 0 : index
    %c0_94 = arith.constant 0 : index
    %69 = vector.load %arg2[%c0_93, %c0_94] : memref<8x72xf32, #tpu.memory_space<vmem>>, vector<8x72xf32>
    %c0_95 = arith.constant 0 : index
    %c0_96 = arith.constant 0 : index
    %70 = vector.load %arg12[%c0_95, %c0_96] : memref<72x288xf32, #tpu.memory_space<vmem>>, vector<72x288xf32>
    %cst_97 = arith.constant dense<0.000000e+00> : vector<8x288xf32>
    %71 = tpu.matmul %69, %70, %cst_97 {dimension_numbers = #tpu.dot_dimension_numbers<[1], [0], [0], [1], [0, 0, 1, 1], [], []>} : vector<8x72xf32>, vector<72x288xf32>, vector<8x288xf32> -> vector<8x288xf32>
    %c0_98 = arith.constant 0 : index
    %c0_99 = arith.constant 0 : index
    %72 = vector.load %arg4[%c0_98, %c0_99] : memref<8x1xf32, #tpu.memory_space<vmem>>, vector<8x1xf32>
    %73 = vector.broadcast %72 : vector<8x1xf32> to vector<8x288xf32>
    %74 = arith.mulf %71, %73 : vector<8x288xf32>
    %c0_100 = arith.constant 0 : index
    %c0_101 = arith.constant 0 : index
    %75 = vector.load %arg5[%c0_100, %c0_101] : memref<8x1xf32, #tpu.memory_space<vmem>>, vector<8x1xf32>
    %76 = vector.broadcast %75 : vector<8x1xf32> to vector<8x288xf32>
    %77 = arith.addf %74, %76 : vector<8x288xf32>
    %cst_102 = arith.constant 0.000000e+00 : f32
    %78 = vector.broadcast %cst_102 : f32 to vector<8x288xf32>
    %79 = arith.maximumf %77, %78 : vector<8x288xf32>
    %cst_103 = arith.constant 0.000000e+00 : f32
    %80 = vector.broadcast %cst_103 : f32 to vector<8x332xf32>
    %c0_104 = arith.constant 0 : index
    %c0_105 = arith.constant 0 : index
    %81 = vector.load %arg11[%c0_104, %c0_105] : memref<8x332xf32, #tpu.memory_space<vmem>>, vector<8x332xf32>
    tpu.vector_store %arg11[%c0_104, %c0_105], %80 {strides = array<i32>} : memref<8x332xf32, #tpu.memory_space<vmem>>, vector<8x332xf32>,
    %82 = vector.broadcast %50 : vector<1x288xf32> to vector<8x288xf32>
    %83 = arith.mulf %79, %82 : vector<8x288xf32>
    %c0_106 = arith.constant 0 : index
    %c19_107 = arith.constant 19 : index
    %84 = vector.load %arg11[%c0_106, %c19_107] : memref<8x332xf32, #tpu.memory_space<vmem>>, vector<8x288xf32>
    tpu.vector_store %arg11[%c0_106, %c19_107], %83 {strides = array<i32>} : memref<8x332xf32, #tpu.memory_space<vmem>>, vector<8x288xf32>,
    %c0_108 = arith.constant 0 : index
    %c0_109 = arith.constant 0 : index
    %85 = vector.load %arg11[%c0_108, %c0_109] : memref<8x332xf32, #tpu.memory_space<vmem>>, vector<8x288xf32>
    %c0_110 = arith.constant 0 : index
    %c0_111 = arith.constant 0 : index
    %86 = vector.load %arg12[%c0_110, %c0_111] : memref<72x288xf32, #tpu.memory_space<vmem>>, vector<8x288xf32>
    tpu.vector_store %arg12[%c0_110, %c0_111], %85 {strides = array<i32>} : memref<72x288xf32, #tpu.memory_space<vmem>>, vector<8x288xf32>,
    %c0_112 = arith.constant 0 : index
    %c1_113 = arith.constant 1 : index
    %87 = vector.load %arg11[%c0_112, %c1_113] : memref<8x332xf32, #tpu.memory_space<vmem>>, vector<8x288xf32>
    %c8_114 = arith.constant 8 : index
    %c0_115 = arith.constant 0 : index
    %88 = vector.load %arg12[%c8_114, %c0_115] : memref<72x288xf32, #tpu.memory_space<vmem>>, vector<8x288xf32>
    tpu.vector_store %arg12[%c8_114, %c0_115], %87 {strides = array<i32>} : memref<72x288xf32, #tpu.memory_space<vmem>>, vector<8x288xf32>,
    %c0_116 = arith.constant 0 : index
    %c2_117 = arith.constant 2 : index
    %89 = vector.load %arg11[%c0_116, %c2_117] : memref<8x332xf32, #tpu.memory_space<vmem>>, vector<8x288xf32>
    %c16_118 = arith.constant 16 : index
    %c0_119 = arith.constant 0 : index
    %90 = vector.load %arg12[%c16_118, %c0_119] : memref<72x288xf32, #tpu.memory_space<vmem>>, vector<8x288xf32>
    tpu.vector_store %arg12[%c16_118, %c0_119], %89 {strides = array<i32>} : memref<72x288xf32, #tpu.memory_space<vmem>>, vector<8x288xf32>,
    %c0_120 = arith.constant 0 : index
    %c18_121 = arith.constant 18 : index
    %91 = vector.load %arg11[%c0_120, %c18_121] : memref<8x332xf32, #tpu.memory_space<vmem>>, vector<8x288xf32>
    %c24_122 = arith.constant 24 : index
    %c0_123 = arith.constant 0 : index
    %92 = vector.load %arg12[%c24_122, %c0_123] : memref<72x288xf32, #tpu.memory_space<vmem>>, vector<8x288xf32>
    tpu.vector_store %arg12[%c24_122, %c0_123], %91 {strides = array<i32>} : memref<72x288xf32, #tpu.memory_space<vmem>>, vector<8x288xf32>,
    %c0_124 = arith.constant 0 : index
    %c19_125 = arith.constant 19 : index
    %93 = vector.load %arg11[%c0_124, %c19_125] : memref<8x332xf32, #tpu.memory_space<vmem>>, vector<8x288xf32>
    %c32_126 = arith.constant 32 : index
    %c0_127 = arith.constant 0 : index
    %94 = vector.load %arg12[%c32_126, %c0_127] : memref<72x288xf32, #tpu.memory_space<vmem>>, vector<8x288xf32>
    tpu.vector_store %arg12[%c32_126, %c0_127], %93 {strides = array<i32>} : memref<72x288xf32, #tpu.memory_space<vmem>>, vector<8x288xf32>,
    %c0_128 = arith.constant 0 : index
    %c20_129 = arith.constant 20 : index
    %95 = vector.load %arg11[%c0_128, %c20_129] : memref<8x332xf32, #tpu.memory_space<vmem>>, vector<8x288xf32>
    %c40_130 = arith.constant 40 : index
    %c0_131 = arith.constant 0 : index
    %96 = vector.load %arg12[%c40_130, %c0_131] : memref<72x288xf32, #tpu.memory_space<vmem>>, vector<8x288xf32>
    tpu.vector_store %arg12[%c40_130, %c0_131], %95 {strides = array<i32>} : memref<72x288xf32, #tpu.memory_space<vmem>>, vector<8x288xf32>,
    %c0_132 = arith.constant 0 : index
    %c36_133 = arith.constant 36 : index
    %97 = vector.load %arg11[%c0_132, %c36_133] : memref<8x332xf32, #tpu.memory_space<vmem>>, vector<8x288xf32>
    %c48_134 = arith.constant 48 : index
    %c0_135 = arith.constant 0 : index
    %98 = vector.load %arg12[%c48_134, %c0_135] : memref<72x288xf32, #tpu.memory_space<vmem>>, vector<8x288xf32>
    tpu.vector_store %arg12[%c48_134, %c0_135], %97 {strides = array<i32>} : memref<72x288xf32, #tpu.memory_space<vmem>>, vector<8x288xf32>,
    %c0_136 = arith.constant 0 : index
    %c37_137 = arith.constant 37 : index
    %99 = vector.load %arg11[%c0_136, %c37_137] : memref<8x332xf32, #tpu.memory_space<vmem>>, vector<8x288xf32>
    %c56_138 = arith.constant 56 : index
    %c0_139 = arith.constant 0 : index
    %100 = vector.load %arg12[%c56_138, %c0_139] : memref<72x288xf32, #tpu.memory_space<vmem>>, vector<8x288xf32>
    tpu.vector_store %arg12[%c56_138, %c0_139], %99 {strides = array<i32>} : memref<72x288xf32, #tpu.memory_space<vmem>>, vector<8x288xf32>,
    %c0_140 = arith.constant 0 : index
    %c38_141 = arith.constant 38 : index
    %101 = vector.load %arg11[%c0_140, %c38_141] : memref<8x332xf32, #tpu.memory_space<vmem>>, vector<8x288xf32>
    %c64_142 = arith.constant 64 : index
    %c0_143 = arith.constant 0 : index
    %102 = vector.load %arg12[%c64_142, %c0_143] : memref<72x288xf32, #tpu.memory_space<vmem>>, vector<8x288xf32>
    tpu.vector_store %arg12[%c64_142, %c0_143], %101 {strides = array<i32>} : memref<72x288xf32, #tpu.memory_space<vmem>>, vector<8x288xf32>,
    %c0_144 = arith.constant 0 : index
    %c0_145 = arith.constant 0 : index
    %103 = vector.load %arg3[%c0_144, %c0_145] : memref<8x72xf32, #tpu.memory_space<vmem>>, vector<8x72xf32>
    %c0_146 = arith.constant 0 : index
    %c0_147 = arith.constant 0 : index
    %104 = vector.load %arg12[%c0_146, %c0_147] : memref<72x288xf32, #tpu.memory_space<vmem>>, vector<72x288xf32>
    %cst_148 = arith.constant dense<0.000000e+00> : vector<8x288xf32>
    %105 = tpu.matmul %103, %104, %cst_148 {dimension_numbers = #tpu.dot_dimension_numbers<[1], [0], [0], [1], [0, 0, 1, 1], [], []>} : vector<8x72xf32>, vector<72x288xf32>, vector<8x288xf32> -> vector<8x288xf32>
    %c0_149 = arith.constant 0 : index
    %c19_150 = arith.constant 19 : index
    %106 = vector.load %arg10[%c0_149, %c19_150] : memref<8x332xf32, #tpu.memory_space<vmem>>, vector<8x288xf32>
    %c0_151 = arith.constant 0 : index
    %c0_152 = arith.constant 0 : index
    %107 = vector.load %arg6[%c0_151, %c0_152] : memref<8x1xf32, #tpu.memory_space<vmem>>, vector<8x1xf32>
    %108 = vector.broadcast %107 : vector<8x1xf32> to vector<8x288xf32>
    %109 = arith.mulf %105, %108 : vector<8x288xf32>
    %c0_153 = arith.constant 0 : index
    %c0_154 = arith.constant 0 : index
    %110 = vector.load %arg7[%c0_153, %c0_154] : memref<8x1xf32, #tpu.memory_space<vmem>>, vector<8x1xf32>
    %111 = vector.broadcast %110 : vector<8x1xf32> to vector<8x288xf32>
    %112 = arith.addf %109, %111 : vector<8x288xf32>
    %113 = arith.addf %112, %106 : vector<8x288xf32>
    %cst_155 = arith.constant 0.000000e+00 : f32
    %114 = vector.broadcast %cst_155 : f32 to vector<8x288xf32>
    %115 = arith.maximumf %113, %114 : vector<8x288xf32>
    %c0_156 = arith.constant 0 : index
    %c0_157 = arith.constant 0 : index
    %c0_158 = arith.constant 0 : index
    %116 = vector.load %arg9[%c0_156, %c0_157, %c0_158] : memref<1x8x288xf32, #tpu.memory_space<vmem>>, vector<1x8x288xf32>
    %117 = vector.shape_cast %116 : vector<1x8x288xf32> to vector<8x288xf32>
    %118 = vector.shape_cast %115 : vector<8x288xf32> to vector<1x8x288xf32>
    tpu.vector_store %arg9[%c0_156, %c0_157, %c0_158], %118 {strides = array<i32>} : memref<1x8x288xf32, #tpu.memory_space<vmem>>, vector<1x8x288xf32>,
    return
  }
  func.func @transform_0(%arg0: i32) -> (i32, i32, i32, i32) {
    %c0_i32 = arith.constant 0 : i32
    %c0_i32_0 = arith.constant 0 : i32
    %c0_i32_1 = arith.constant 0 : i32
    %c0_i32_2 = arith.constant 0 : i32
    return %arg0, %c0_i32, %c0_i32_0, %c0_i32_1 : i32, i32, i32, i32
  }
  func.func @transform_1(%arg0: i32) -> (i32, i32) {
    %c0_i32 = arith.constant 0 : i32
    %c0_i32_0 = arith.constant 0 : i32
    %c0_i32_1 = arith.constant 0 : i32
    return %c0_i32, %c0_i32_0 : i32, i32
  }
  func.func @transform_2(%arg0: i32) -> (i32, i32) {
    %c0_i32 = arith.constant 0 : i32
    %c0_i32_0 = arith.constant 0 : i32
    %c0_i32_1 = arith.constant 0 : i32
    return %c0_i32, %c0_i32_0 : i32, i32
  }
  func.func @transform_3(%arg0: i32) -> (i32, i32) {
    %c0_i32 = arith.constant 0 : i32
    %c0_i32_0 = arith.constant 0 : i32
    %c0_i32_1 = arith.constant 0 : i32
    return %c0_i32, %c0_i32_0 : i32, i32
  }
  func.func @transform_4(%arg0: i32) -> (i32, i32) {
    %c0_i32 = arith.constant 0 : i32
    %c0_i32_0 = arith.constant 0 : i32
    %c0_i32_1 = arith.constant 0 : i32
    return %c0_i32, %c0_i32_0 : i32, i32
  }
  func.func @transform_5(%arg0: i32) -> (i32, i32) {
    %c0_i32 = arith.constant 0 : i32
    %c0_i32_0 = arith.constant 0 : i32
    %c0_i32_1 = arith.constant 0 : i32
    return %c0_i32, %c0_i32_0 : i32, i32
  }
  func.func @transform_6(%arg0: i32) -> (i32, i32) {
    %c0_i32 = arith.constant 0 : i32
    %c0_i32_0 = arith.constant 0 : i32
    %c0_i32_1 = arith.constant 0 : i32
    return %c0_i32, %c0_i32_0 : i32, i32
  }
  func.func @transform_7(%arg0: i32) -> (i32, i32) {
    %c0_i32 = arith.constant 0 : i32
    %c0_i32_0 = arith.constant 0 : i32
    %c0_i32_1 = arith.constant 0 : i32
    return %c0_i32, %c0_i32_0 : i32, i32
  }
  func.func @transform_8(%arg0: i32) -> (i32, i32, i32) {
    %c0_i32 = arith.constant 0 : i32
    %c0_i32_0 = arith.constant 0 : i32
    %c0_i32_1 = arith.constant 0 : i32
    return %arg0, %c0_i32, %c0_i32_0 : i32, i32, i32
  }
}

</mosaic_0001>

<llo_original>
// kernel: basic_block_forward.1
$region0: #{basic_block_forward.1}
  #allocation0 [shape = 'u32[]', space=smem, size = 0x4, offset = 0x4, fixed_abs, tag = 'smem constant byte address 0x4 - core index']
  #allocation1 [shape = 'u32[144,128]{1,0:T(1,128)}', space=vmem, size = 0x12000, scoped, tag = 'internal scratch']
  #allocation2 [shape = 'f32[8,332]{1,0:T(8,128)}', space=vmem, size = 0x3000, scoped, tag = 'scratch operand']
  #allocation3 [shape = 'f32[8,332]{1,0:T(8,128)}', space=vmem, size = 0x3000, scoped, tag = 'scratch operand']
  #allocation4 [shape = 'f32[72,288]{1,0:T(8,128)}', space=vmem, size = 0x1b000, scoped, tag = 'scratch operand']
  %s0 = inlined_call_operand.hbm [shape: f32[2,8,16,16], index: 0, kind: input, shape index: {}]
  %s1 = inlined_call_operand.vmem [shape: f32[8,72], index: 1, kind: input, shape index: {}]
  %s2 = inlined_call_operand.vmem [shape: f32[8,72], index: 2, kind: input, shape index: {}]
  %s3 = inlined_call_operand.vmem [shape: f32[8,1], index: 3, kind: input, shape index: {}]
  %s4 = inlined_call_operand.vmem [shape: f32[8,1], index: 4, kind: input, shape index: {}]
  %s5 = inlined_call_operand.vmem [shape: f32[8,1], index: 5, kind: input, shape index: {}]
  %s6 = inlined_call_operand.vmem [shape: f32[8,1], index: 6, kind: input, shape index: {}]
  %s7 = inlined_call_operand.vmem [shape: f32[1,288], index: 7, kind: input, shape index: {}]
  %s8 = inlined_call_operand.vmem [shape: f32[2,8,288], index: 8, kind: output, shape index: {}]
  %s9 = sld [smem:[#allocation0]]
  $region69: #{basic_block_forward.1} parent=0
    _
  %s11 = ssub.s32 1, %s9
  %s12 = scalar_select 0, %s11, %s9
  $region1: #{basic_block_forward.1} parent=0
    #allocation5 [shape = 'u8[131072]{0}', space=vmem, size = 0x20000, scoped, tag = 'input window, operand 0']
    #allocation6 [shape = 's32[2]{0}', space=sflag, size = 0x8, scoped, tag = 'scoped memory for basic_block_forward.1']
    %13 = vsyncpa [#allocation6], 0
    %s14 = scalar_lea.sflag [#allocation6], 1
    %15 = vsyncpa %s14, 0
    loop: start=0, step=1, limit=4
    $region2: #{basic_block_forward.1} parent=1 // loop_pre_header
      _
    $region3: #{basic_block_forward.1} parent=1 // loop_header
      %s17 = sphi 0, %s21
      %p18 = scmp.ge.s32.totalorder %s17, 4
      %s27 = sphi 0, %s29
      %s30 = sphi 0, %s27
      %s31 = sphi 0, %s30
      %s47 = sphi 0, %s31
      %s51 = sphi 0, %s51
      %s53 = sphi 0, %s51
      %s54 = sphi 0, %s53
      %s68 = sphi 0, %s54
      %s72 = sphi 0, %s72
      %s74 = sphi 0, %s72
      %s75 = sphi 0, %s74
      %s89 = sphi 0, %s75
      %s93 = sphi 0, %s93
      %s95 = sphi 0, %s93
      %s96 = sphi 0, %s95
      %s110 = sphi 0, %s96
      %s114 = sphi 0, %s114
      %s116 = sphi 0, %s114
      %s117 = sphi 0, %s116
      %s131 = sphi 0, %s117
      %s135 = sphi 0, %s135
      %s137 = sphi 0, %s135
      %s138 = sphi 0, %s137
      %s152 = sphi 0, %s138
      %s156 = sphi 0, %s156
      %s158 = sphi 0, %s156
      %s159 = sphi 0, %s158
      %s173 = sphi 0, %s159
      %s177 = sphi 0, %s177
      %s179 = sphi 0, %s177
      %s180 = sphi 0, %s179
      %s194 = sphi 0, %s180
      %s200 = sphi 0, %s202
      %s203 = sphi 0, %s200
      %s204 = sphi 0, %s203
      %s220 = sphi 0, %s204
    $region4: #{basic_block_forward.1} parent=1 // loop_header_branch
      %20 = sbr.rel (%p18) target = $region8
    $region5: #{basic_block_forward.1} parent=1 // loop_body
      %s22 = ssub.s32 %s17, 1
      %s23 = ssub.s32 %s17, 2
      %s24 = sadd.s32 %s17, 1
      %s25 = ssub.s32 %s17, %s24
      %p26 = scmp.eq.s32.totalorder %s25, 0
      %s28 = sadd.s32 %s27, 1
      %s29 = scalar_select %p26, %s27, %s28
      %p32 = pneg %p26
      %p33 = scmp.eq.s32.totalorder %s17, 1
      %p34 = por %p32, %p33
      %p35 = scmp.ne.s32.totalorder %s27, %s30
      %p36 = scmp.eq.s32.totalorder %s17, 0
      %p37 = por %p35, %p36
      %p38 = scmp.ne.s32.totalorder %s27, %s30
      %p39 = scmp.eq.s32.totalorder %s22, 1
      %p40 = por %p38, %p39
      %p41 = scmp.ne.s32.totalorder %s30, %s31
      %p42 = scmp.eq.s32.totalorder %s22, 0
      %p43 = por %p41, %p42
      %p44 = scmp.ne.s32.totalorder %s30, %s31
      %p45 = scmp.eq.s32.totalorder %s23, 1
      %p46 = por %p44, %p45
      %p48 = scmp.ne.s32.totalorder %s31, %s47
      %p49 = scmp.eq.s32.totalorder %s23, 0
      %p50 = por %p48, %p49
      %s52 = sadd.s32 %s51, 1
      %p55 = scmp.eq.s32.totalorder %s17, 1
      %p56 = scmp.ne.s32.totalorder %s51, %s53
      %p57 = scmp.eq.s32.totalorder %s17, 0
      %p58 = por %p56, %p57
      %p59 = scmp.ne.s32.totalorder %s51, %s53
      %p60 = scmp.eq.s32.totalorder %s22, 1
      %p61 = por %p59, %p60
      %p62 = scmp.ne.s32.totalorder %s53, %s54
      %p63 = scmp.eq.s32.totalorder %s22, 0
      %p64 = por %p62, %p63
      %p65 = scmp.ne.s32.totalorder %s53, %s54
      %p66 = scmp.eq.s32.totalorder %s23, 1
      %p67 = por %p65, %p66
      %p69 = scmp.ne.s32.totalorder %s54, %s68
      %p70 = scmp.eq.s32.totalorder %s23, 0
      %p71 = por %p69, %p70
      %s73 = sadd.s32 %s72, 1
      %p76 = scmp.eq.s32.totalorder %s17, 1
      %p77 = scmp.ne.s32.totalorder %s72, %s74
      %p78 = scmp.eq.s32.totalorder %s17, 0
      %p79 = por %p77, %p78
      %p80 = scmp.ne.s32.totalorder %s72, %s74
      %p81 = scmp.eq.s32.totalorder %s22, 1
      %p82 = por %p80, %p81
      %p83 = scmp.ne.s32.totalorder %s74, %s75
      %p84 = scmp.eq.s32.totalorder %s22, 0
      %p85 = por %p83, %p84
      %p86 = scmp.ne.s32.totalorder %s74, %s75
      %p87 = scmp.eq.s32.totalorder %s23, 1
      %p88 = por %p86, %p87
      %p90 = scmp.ne.s32.totalorder %s75, %s89
      %p91 = scmp.eq.s32.totalorder %s23, 0
      %p92 = por %p90, %p91
      %s94 = sadd.s32 %s93, 1
      %p97 = scmp.eq.s32.totalorder %s17, 1
      %p98 = scmp.ne.s32.totalorder %s93, %s95
      %p99 = scmp.eq.s32.totalorder %s17, 0
      %p100 = por %p98, %p99
      %p101 = scmp.ne.s32.totalorder %s93, %s95
      %p102 = scmp.eq.s32.totalorder %s22, 1
      %p103 = por %p101, %p102
      %p104 = scmp.ne.s32.totalorder %s95, %s96
      %p105 = scmp.eq.s32.totalorder %s22, 0
      %p106 = por %p104, %p105
      %p107 = scmp.ne.s32.totalorder %s95, %s96
      %p108 = scmp.eq.s32.totalorder %s23, 1
      %p109 = por %p107, %p108
      %p111 = scmp.ne.s32.totalorder %s96, %s110
      %p112 = scmp.eq.s32.totalorder %s23, 0
      %p113 = por %p111, %p112
      %s115 = sadd.s32 %s114, 1
      %p118 = scmp.eq.s32.totalorder %s17, 1
      %p119 = scmp.ne.s32.totalorder %s114, %s116
      %p120 = scmp.eq.s32.totalorder %s17, 0
      %p121 = por %p119, %p120
      %p122 = scmp.ne.s32.totalorder %s114, %s116
      %p123 = scmp.eq.s32.totalorder %s22, 1
      %p124 = por %p122, %p123
      %p125 = scmp.ne.s32.totalorder %s116, %s117
      %p126 = scmp.eq.s32.totalorder %s22, 0
      %p127 = por %p125, %p126
      %p128 = scmp.ne.s32.totalorder %s116, %s117
      %p129 = scmp.eq.s32.totalorder %s23, 1
      %p130 = por %p128, %p129
      %p132 = scmp.ne.s32.totalorder %s117, %s131
      %p133 = scmp.eq.s32.totalorder %s23, 0
      %p134 = por %p132, %p133
      %s136 = sadd.s32 %s135, 1
      %p139 = scmp.eq.s32.totalorder %s17, 1
      %p140 = scmp.ne.s32.totalorder %s135, %s137
      %p141 = scmp.eq.s32.totalorder %s17, 0
      %p142 = por %p140, %p141
      %p143 = scmp.ne.s32.totalorder %s135, %s137
      %p144 = scmp.eq.s32.totalorder %s22, 1
      %p145 = por %p143, %p144
      %p146 = scmp.ne.s32.totalorder %s137, %s138
      %p147 = scmp.eq.s32.totalorder %s22, 0
      %p148 = por %p146, %p147
      %p149 = scmp.ne.s32.totalorder %s137, %s138
      %p150 = scmp.eq.s32.totalorder %s23, 1
      %p151 = por %p149, %p150
      %p153 = scmp.ne.s32.totalorder %s138, %s152
      %p154 = scmp.eq.s32.totalorder %s23, 0
      %p155 = por %p153, %p154
      %s157 = sadd.s32 %s156, 1
      %p160 = scmp.eq.s32.totalorder %s17, 1
      %p161 = scmp.ne.s32.totalorder %s156, %s158
      %p162 = scmp.eq.s32.totalorder %s17, 0
      %p163 = por %p161, %p162
      %p164 = scmp.ne.s32.totalorder %s156, %s158
      %p165 = scmp.eq.s32.totalorder %s22, 1
      %p166 = por %p164, %p165
      %p167 = scmp.ne.s32.totalorder %s158, %s159
      %p168 = scmp.eq.s32.totalorder %s22, 0
      %p169 = por %p167, %p168
      %p170 = scmp.ne.s32.totalorder %s158, %s159
      %p171 = scmp.eq.s32.totalorder %s23, 1
      %p172 = por %p170, %p171
      %p174 = scmp.ne.s32.totalorder %s159, %s173
      %p175 = scmp.eq.s32.totalorder %s23, 0
      %p176 = por %p174, %p175
      %s178 = sadd.s32 %s177, 1
      %p181 = scmp.eq.s32.totalorder %s17, 1
      %p182 = scmp.ne.s32.totalorder %s177, %s179
      %p183 = scmp.eq.s32.totalorder %s17, 0
      %p184 = por %p182, %p183
      %p185 = scmp.ne.s32.totalorder %s177, %s179
      %p186 = scmp.eq.s32.totalorder %s22, 1
      %p187 = por %p185, %p186
      %p188 = scmp.ne.s32.totalorder %s179, %s180
      %p189 = scmp.eq.s32.totalorder %s22, 0
      %p190 = por %p188, %p189
      %p191 = scmp.ne.s32.totalorder %s179, %s180
      %p192 = scmp.eq.s32.totalorder %s23, 1
      %p193 = por %p191, %p192
      %p195 = scmp.ne.s32.totalorder %s180, %s194
      %p196 = scmp.eq.s32.totalorder %s23, 0
      %p197 = por %p195, %p196
      %s198 = ssub.s32 %s17, %s24
      %p199 = scmp.eq.s32.totalorder %s198, 0
      %s201 = sadd.s32 %s200, 1
      %s202 = scalar_select %p199, %s200, %s201
      %p205 = pneg %p199
      %p206 = scmp.eq.s32.totalorder %s17, 1
      %p207 = por %p205, %p206
      %p208 = scmp.ne.s32.totalorder %s200, %s203
      %p209 = scmp.eq.s32.totalorder %s17, 0
      %p210 = por %p208, %p209
      %p211 = scmp.ne.s32.totalorder %s200, %s203
      %p212 = scmp.eq.s32.totalorder %s22, 1
      %p213 = por %p211, %p212
      %p214 = scmp.ne.s32.totalorder %s203, %s204
      %p215 = scmp.eq.s32.totalorder %s22, 0
      %p216 = por %p214, %p215
      %p217 = scmp.ne.s32.totalorder %s203, %s204
      %p218 = scmp.eq.s32.totalorder %s23, 1
      %p219 = por %p217, %p218
      %p221 = scmp.ne.s32.totalorder %s204, %s220
      %p222 = scmp.eq.s32.totalorder %s23, 0
      %p223 = por %p221, %p222
      %p224 = scmp.le.s32.totalorder 1, %s17
      %p225 = scmp.lt.s32.totalorder %s17, 3
      %p226 = pnand %p224, %p225
      %p227 = pneg %p226
      // Predicated region
      $region9: #{basic_block_forward.1} parent=5 // pred_check
        _
      $region10: #{basic_block_forward.1} parent=5 // pred_check_branch
        %229 = sbr.rel (%p226) target = $region12
      $region11: #{basic_block_forward.1} parent=5 // pred_region
        %s230 = ssub.s32 %s17, 1
        // Predicated region
        $region13: #{basic_block_forward.1} parent=11 // pred_check
          %p231 = pneg %p64
        $region14: #{basic_block_forward.1} parent=11 // pred_check_branch
          %233 = sbr.rel (%p231) target = $region16
        $region15: #{basic_block_forward.1} parent=11 // pred_region
          _
        $region16: #{basic_block_forward.1} parent=11 // pred_fallthru
          _
        // Predicated region
        $region17: #{basic_block_forward.1} parent=11 // pred_check
          %p234 = pneg %p85
        $region18: #{basic_block_forward.1} parent=11 // pred_check_branch
          %236 = sbr.rel (%p234) target = $region20
        $region19: #{basic_block_forward.1} parent=11 // pred_region
          _
        $region20: #{basic_block_forward.1} parent=11 // pred_fallthru
          _
        // Predicated region
        $region21: #{basic_block_forward.1} parent=11 // pred_check
          %p237 = pneg %p106
        $region22: #{basic_block_forward.1} parent=11 // pred_check_branch
          %239 = sbr.rel (%p237) target = $region24
        $region23: #{basic_block_forward.1} parent=11 // pred_region
          _
        $region24: #{basic_block_forward.1} parent=11 // pred_fallthru
          _
        // Predicated region
        $region25: #{basic_block_forward.1} parent=11 // pred_check
          %p240 = pneg %p127
        $region26: #{basic_block_forward.1} parent=11 // pred_check_branch
          %242 = sbr.rel (%p240) target = $region28
        $region27: #{basic_block_forward.1} parent=11 // pred_region
          _
        $region28: #{basic_block_forward.1} parent=11 // pred_fallthru
          _
        // Predicated region
        $region29: #{basic_block_forward.1} parent=11 // pred_check
          %p243 = pneg %p148
        $region30: #{basic_block_forward.1} parent=11 // pred_check_branch
          %245 = sbr.rel (%p243) target = $region32
        $region31: #{basic_block_forward.1} parent=11 // pred_region
          _
        $region32: #{basic_block_forward.1} parent=11 // pred_fallthru
          _
        // Predicated region
        $region33: #{basic_block_forward.1} parent=11 // pred_check
          %p246 = pneg %p169
        $region34: #{basic_block_forward.1} parent=11 // pred_check_branch
          %248 = sbr.rel (%p246) target = $region36
        $region35: #{basic_block_forward.1} parent=11 // pred_region
          _
        $region36: #{basic_block_forward.1} parent=11 // pred_fallthru
          _
        // Predicated region
        $region37: #{basic_block_forward.1} parent=11 // pred_check
          %p249 = pneg %p190
        $region38: #{basic_block_forward.1} parent=11 // pred_check_branch
          %251 = sbr.rel (%p249) target = $region40
        $region39: #{basic_block_forward.1} parent=11 // pred_region
          _
        $region40: #{basic_block_forward.1} parent=11 // pred_fallthru
          _
      $region12: #{basic_block_forward.1} parent=5 // pred_fallthru
        _
      %p252 = scmp.lt.s32.totalorder %s17, 2
      // Predicated region
      $region41: #{basic_block_forward.1} parent=5 // pred_check
        %p253 = pneg %p252
      $region42: #{basic_block_forward.1} parent=5 // pred_check_branch
        %255 = sbr.rel (%p253) target = $region44
      $region43: #{basic_block_forward.1} parent=5 // pred_region
        // Predicated region
        $region45: #{basic_block_forward.1} parent=43 // pred_check
          %p256 = pneg %p37
        $region46: #{basic_block_forward.1} parent=43 // pred_check_branch
          %258 = sbr.rel (%p256) target = $region48
        $region47: #{basic_block_forward.1} parent=43 // pred_region
          %s259 = sand.u32 %s27, 1
          %s260 = scalar_lea.sflag [#allocation6], %s259
          %s261 = sand.u32 %s27, 1
          %s262 = smul.addr %s261, 128
          %s263 = scalar_lea.vmem [#allocation5], %s262
          %s265 = ssub.s32 2048, 2048
          %266 = vsyncadd %s260, %s265
          %s267 = smul.addr %s17, 16
          %s268 = smul.addr %s267, 128
          %s269 = scalar_lea.hbm %s0, %s268
          %s270 = sshll.u32 %s263, 4
          %s271 = int_to_ptr.vmem [resolvable:$true] %s270
          %276 = dma.hbm_to_vmem [thread:$0]  %s269, 2048, %s271, %s260, 128, 128, 8
        $region48: #{basic_block_forward.1} parent=43 // pred_fallthru
          _
      $region44: #{basic_block_forward.1} parent=5 // pred_fallthru
        _
      %p277 = scmp.le.s32.totalorder 1, %s17
      %p278 = scmp.lt.s32.totalorder %s17, 3
      %p279 = pnand %p277, %p278
      %p280 = pneg %p279
      // Predicated region
      $region49: #{basic_block_forward.1} parent=5 // pred_check
        _
      $region50: #{basic_block_forward.1} parent=5 // pred_check_branch
        %282 = sbr.rel (%p279) target = $region52
      $region51: #{basic_block_forward.1} parent=5 // pred_region
        %s283 = ssub.s32 %s17, 1
        %s284 = sand.u32 %s30, 1
        %s285 = scalar_lea.sflag [#allocation6], %s284
        %s286 = sand.u32 %s30, 1
        %s287 = smul.addr %s286, 128
        %s288 = scalar_lea.vmem [#allocation5], %s287
        // Predicated region
        $region53: #{basic_block_forward.1} parent=51 // pred_check
          %p289 = pneg %p43
        $region54: #{basic_block_forward.1} parent=51 // pred_check_branch
          %291 = sbr.rel (%p289) target = $region56
        $region55: #{basic_block_forward.1} parent=51 // pred_region
          %292 = dma.done %s285, 2048
        $region56: #{basic_block_forward.1} parent=51 // pred_fallthru
          _
        %s293 = sand.u32 %s30, 1
        %s294 = scalar_lea.sflag [#allocation6], %s293
        %s295 = sand.u32 %s30, 1
        %s296 = smul.addr %s295, 128
        %s297 = scalar_lea.vmem [#allocation5], %s296
        %p298 = pneg %p43
        %p299 = pneg %p40
        %p300 = pneg %p64
        %p301 = pneg %p61
        %p302 = pneg %p85
        %p303 = pneg %p82
        %p304 = pneg %p106
        %p305 = pneg %p103
        %p306 = pneg %p127
        %p307 = pneg %p124
        %p308 = pneg %p148
        %p309 = pneg %p145
        %p310 = pneg %p169
        %p311 = pneg %p166
        %p312 = pneg %p190
        %p313 = pneg %p187
        %p314 = pneg %p216
        %p315 = pneg %p213
        %p316 = scmp.lt.s32.totalorder %s22, 1
        %s317 = scalar_select %p316, %s22, 1
        %s318 = smul.addr %s317, 3
        %s319 = smul.addr %s318, 8
        %s320 = scalar_lea.vmem %s8, %s319
        %p321 = scmp.lt.s32.totalorder %s22, 1
        %s322 = scalar_select %p321, %s22, 1
        %s323 = smul.addr %s322, 3
        %s324 = smul.addr %s323, 8
        %s325 = scalar_lea.vmem %s8, %s324
        %326 = vst [vmem:[#allocation2] sm:$0xff] 0.0
        %327 = vst [vmem:[#allocation2 + $0x8] sm:$0xff] 0.0
        %vm328 = vcmask 621568
        %329 = vst.msk [vmem:[#allocation2 + $0x10] sm:$0xff] %vm328, 0.0
        %v330 = vld [vmem:[%s288] sm:$0x1]
        %v331 = vld [vmem:[%s288 + $0x10] sm:$0x1]
        %v332 = vld [vmem:[%s288 + $0x20] sm:$0x1]
        %v333 = vld [vmem:[%s288 + $0x30] sm:$0x1]
        %v334 = vld [vmem:[%s288 + $0x40] sm:$0x1]
        %v335 = vld [vmem:[%s288 + $0x50] sm:$0x1]
        %v336 = vld [vmem:[%s288 + $0x60] sm:$0x1]
        %v337 = vld [vmem:[%s288 + $0x70] sm:$0x1]
        %v346 = vrot.slane %v331, 7
        %vm347 = vcmask 1041409
        %v348 = vsel %vm347, %v346, %v330
        %v349 = vrot.slane %v332, 6
        %vm350 = vcmask 1042434
        %v351 = vsel %vm350, %v349, %v348
        %v352 = vrot.slane %v333, 5
        %vm353 = vcmask 1043459
        %v354 = vsel %vm353, %v352, %v351
        %v355 = vrot.slane %v334, 4
        %vm356 = vcmask 1044484
        %v357 = vsel %vm356, %v355, %v354
        %v358 = vrot.slane %v335, 3
        %vm359 = vcmask 1045509
        %v360 = vsel %vm359, %v358, %v357
        %v361 = vrot.slane %v336, 2
        %vm362 = vcmask 1046534
        %v363 = vsel %vm362, %v361, %v360
        %v364 = vrot.slane %v337, 1
        %vm365 = vcmask 1047559
        %v366 = vsel %vm365, %v364, %v363
        %367 = vrot.lane.b32.xlu0 %v366, 19
        %v368 = vpop.permute.xlu0 %367
        %vm370 = vcmask 285848
        %371 = vst.msk [vmem:[#allocation2] sm:$0xff] %vm370, %v368
        %v372 = vld [vmem:[%s288 + $0x1] sm:$0x1]
        %v373 = vld [vmem:[%s288 + $0x11] sm:$0x1]
        %v374 = vld [vmem:[%s288 + $0x21] sm:$0x1]
        %v375 = vld [vmem:[%s288 + $0x31] sm:$0x1]
        %v376 = vld [vmem:[%s288 + $0x41] sm:$0x1]
        %v377 = vld [vmem:[%s288 + $0x51] sm:$0x1]
        %v378 = vld [vmem:[%s288 + $0x61] sm:$0x1]
        %v379 = vld [vmem:[%s288 + $0x71] sm:$0x1]
        %v388 = vrot.slane %v373, 7
        %v389 = vsel %vm347, %v388, %v372
        %v390 = vrot.slane %v374, 6
        %v391 = vsel %vm350, %v390, %v389
        %v392 = vrot.slane %v375, 5
        %v393 = vsel %vm353, %v392, %v391
        %v394 = vrot.slane %v376, 4
        %v395 = vsel %vm356, %v394, %v393
        %v396 = vrot.slane %v377, 3
        %v397 = vsel %vm359, %v396, %v395
        %v398 = vrot.slane %v378, 2
        %v399 = vsel %vm362, %v398, %v397
        %v400 = vrot.slane %v379, 1
        %v401 = vsel %vm365, %v400, %v399
        %402 = vrot.lane.b32.xlu0 %v401, 37
        %v403 = vpop.permute.xlu0 %402
        %vm405 = vcmask 433448
        %406 = vst.msk [vmem:[#allocation2] sm:$0xff] %vm405, %v403
        %v407 = vld [vmem:[%s288 + $0x2] sm:$0x1]
        %v408 = vld [vmem:[%s288 + $0x12] sm:$0x1]
        %v409 = vld [vmem:[%s288 + $0x22] sm:$0x1]
        %v410 = vld [vmem:[%s288 + $0x32] sm:$0x1]
        %v411 = vld [vmem:[%s288 + $0x42] sm:$0x1]
        %v412 = vld [vmem:[%s288 + $0x52] sm:$0x1]
        %v413 = vld [vmem:[%s288 + $0x62] sm:$0x1]
        %v414 = vld [vmem:[%s288 + $0x72] sm:$0x1]
        %v423 = vrot.slane %v408, 7
        %v424 = vsel %vm347, %v423, %v407
        %v425 = vrot.slane %v409, 6
        %v426 = vsel %vm350, %v425, %v424
        %v427 = vrot.slane %v410, 5
        %v428 = vsel %vm353, %v427, %v426
        %v429 = vrot.slane %v411, 4
        %v430 = vsel %vm356, %v429, %v428
        %v431 = vrot.slane %v412, 3
        %v432 = vsel %vm359, %v431, %v430
        %v433 = vrot.slane %v413, 2
        %v434 = vsel %vm362, %v433, %v432
        %v435 = vrot.slane %v414, 1
        %v436 = vsel %vm365, %v435, %v434
        %437 = vrot.lane.b32.xlu0 %v436, 55
        %v438 = vpop.permute.xlu0 %437
        %vm440 = vcmask 581048
        %441 = vst.msk [vmem:[#allocation2] sm:$0xff] %vm440, %v438
        %v442 = vld [vmem:[%s288 + $0x3] sm:$0x1]
        %v443 = vld [vmem:[%s288 + $0x13] sm:$0x1]
        %v444 = vld [vmem:[%s288 + $0x23] sm:$0x1]
        %v445 = vld [vmem:[%s288 + $0x33] sm:$0x1]
        %v446 = vld [vmem:[%s288 + $0x43] sm:$0x1]
        %v447 = vld [vmem:[%s288 + $0x53] sm:$0x1]
        %v448 = vld [vmem:[%s288 + $0x63] sm:$0x1]
        %v449 = vld [vmem:[%s288 + $0x73] sm:$0x1]
        %v458 = vrot.slane %v443, 7
        %v459 = vsel %vm347, %v458, %v442
        %v460 = vrot.slane %v444, 6
        %v461 = vsel %vm350, %v460, %v459
        %v462 = vrot.slane %v445, 5
        %v463 = vsel %vm353, %v462, %v461
        %v464 = vrot.slane %v446, 4
        %v465 = vsel %vm356, %v464, %v463
        %v466 = vrot.slane %v447, 3
        %v467 = vsel %vm359, %v466, %v465
        %v468 = vrot.slane %v448, 2
        %v469 = vsel %vm362, %v468, %v467
        %v470 = vrot.slane %v449, 1
        %v471 = vsel %vm365, %v470, %v469
        %472 = vrot.lane.b32.xlu0 %v471, 73
        %v473 = vpop.permute.xlu0 %472
        %vm475 = vcmask 728648
        %476 = vst.msk [vmem:[#allocation2] sm:$0xff] %vm475, %v473
        %v477 = vld [vmem:[%s288 + $0x4] sm:$0x1]
        %v478 = vld [vmem:[%s288 + $0x14] sm:$0x1]
        %v479 = vld [vmem:[%s288 + $0x24] sm:$0x1]
        %v480 = vld [vmem:[%s288 + $0x34] sm:$0x1]
        %v481 = vld [vmem:[%s288 + $0x44] sm:$0x1]
        %v482 = vld [vmem:[%s288 + $0x54] sm:$0x1]
        %v483 = vld [vmem:[%s288 + $0x64] sm:$0x1]
        %v484 = vld [vmem:[%s288 + $0x74] sm:$0x1]
        %v493 = vrot.slane %v478, 7
        %v494 = vsel %vm347, %v493, %v477
        %v495 = vrot.slane %v479, 6
        %v496 = vsel %vm350, %v495, %v494
        %v497 = vrot.slane %v480, 5
        %v498 = vsel %vm353, %v497, %v496
        %v499 = vrot.slane %v481, 4
        %v500 = vsel %vm356, %v499, %v498
        %v501 = vrot.slane %v482, 3
        %v502 = vsel %vm359, %v501, %v500
        %v503 = vrot.slane %v483, 2
        %v504 = vsel %vm362, %v503, %v502
        %v505 = vrot.slane %v484, 1
        %v506 = vsel %vm365, %v505, %v504
        %507 = vrot.lane.b32.xlu0 %v506, 91
        %v508 = vpop.permute.xlu0 %507
        %vm510 = vcmask 876248
        %511 = vst.msk [vmem:[#allocation2] sm:$0xff] %vm510, %v508
        %v512 = vld [vmem:[%s288 + $0x5] sm:$0x1]
        %v513 = vld [vmem:[%s288 + $0x15] sm:$0x1]
        %v514 = vld [vmem:[%s288 + $0x25] sm:$0x1]
        %v515 = vld [vmem:[%s288 + $0x35] sm:$0x1]
        %v516 = vld [vmem:[%s288 + $0x45] sm:$0x1]
        %v517 = vld [vmem:[%s288 + $0x55] sm:$0x1]
        %v518 = vld [vmem:[%s288 + $0x65] sm:$0x1]
        %v519 = vld [vmem:[%s288 + $0x75] sm:$0x1]
        %v528 = vrot.slane %v513, 7
        %v529 = vsel %vm347, %v528, %v512
        %v530 = vrot.slane %v514, 6
        %v531 = vsel %vm350, %v530, %v529
        %v532 = vrot.slane %v515, 5
        %v533 = vsel %vm353, %v532, %v531
        %v534 = vrot.slane %v516, 4
        %v535 = vsel %vm356, %v534, %v533
        %v536 = vrot.slane %v517, 3
        %v537 = vsel %vm359, %v536, %v535
        %v538 = vrot.slane %v518, 2
        %v539 = vsel %vm362, %v538, %v537
        %v540 = vrot.slane %v519, 1
        %v541 = vsel %vm365, %v540, %v539
        %542 = vrot.lane.b32.xlu0 %v541, 109
        %v543 = vpop.permute.xlu0 %542
        %vm545 = vcmask 1023848
        %546 = vst.msk [vmem:[#allocation2] sm:$0xff] %vm545, %v543
        %v547 = vld [vmem:[%s288 + $0x6] sm:$0x1]
        %v548 = vld [vmem:[%s288 + $0x16] sm:$0x1]
        %v549 = vld [vmem:[%s288 + $0x26] sm:$0x1]
        %v550 = vld [vmem:[%s288 + $0x36] sm:$0x1]
        %v551 = vld [vmem:[%s288 + $0x46] sm:$0x1]
        %v552 = vld [vmem:[%s288 + $0x56] sm:$0x1]
        %v553 = vld [vmem:[%s288 + $0x66] sm:$0x1]
        %v554 = vld [vmem:[%s288 + $0x76] sm:$0x1]
        %v563 = vrot.slane %v548, 7
        %v564 = vsel %vm347, %v563, %v547
        %v565 = vrot.slane %v549, 6
        %v566 = vsel %vm350, %v565, %v564
        %v567 = vrot.slane %v550, 5
        %v568 = vsel %vm353, %v567, %v566
        %v569 = vrot.slane %v551, 4
        %v570 = vsel %vm356, %v569, %v568
        %v571 = vrot.slane %v552, 3
        %v572 = vsel %vm359, %v571, %v570
        %v573 = vrot.slane %v553, 2
        %v574 = vsel %vm362, %v573, %v572
        %v575 = vrot.slane %v554, 1
        %v576 = vsel %vm365, %v575, %v574
        %577 = vrot.lane.b32.xlu0 %v576, 127
        %v578 = vpop.permute.xlu0 %577
        %vm580 = vcmask 1048568
        %581 = vst.msk [vmem:[#allocation2] sm:$0xff] %vm580, %v578
        %vm582 = vcmask 121856
        %583 = vst.msk [vmem:[#allocation2 + $0x8] sm:$0xff] %vm582, %v578
        %v584 = vld [vmem:[%s288 + $0x7] sm:$0x1]
        %v585 = vld [vmem:[%s288 + $0x17] sm:$0x1]
        %v586 = vld [vmem:[%s288 + $0x27] sm:$0x1]
        %v587 = vld [vmem:[%s288 + $0x37] sm:$0x1]
        %v588 = vld [vmem:[%s288 + $0x47] sm:$0x1]
        %v589 = vld [vmem:[%s288 + $0x57] sm:$0x1]
        %v590 = vld [vmem:[%s288 + $0x67] sm:$0x1]
        %v591 = vld [vmem:[%s288 + $0x77] sm:$0x1]
        %v600 = vrot.slane %v585, 7
        %v601 = vsel %vm347, %v600, %v584
        %v602 = vrot.slane %v586, 6
        %v603 = vsel %vm350, %v602, %v601
        %v604 = vrot.slane %v587, 5
        %v605 = vsel %vm353, %v604, %v603
        %v606 = vrot.slane %v588, 4
        %v607 = vsel %vm356, %v606, %v605
        %v608 = vrot.slane %v589, 3
        %v609 = vsel %vm359, %v608, %v607
        %v610 = vrot.slane %v590, 2
        %v611 = vsel %vm362, %v610, %v609
        %v612 = vrot.slane %v591, 1
        %v613 = vsel %vm365, %v612, %v611
        %614 = vrot.lane.b32.xlu0 %v613, 17
        %v615 = vpop.permute.xlu0 %614
        %vm617 = vcmask 269448
        %618 = vst.msk [vmem:[#allocation2 + $0x8] sm:$0xff] %vm617, %v615
        %v619 = vld [vmem:[%s288 + $0x8] sm:$0x1]
        %v620 = vld [vmem:[%s288 + $0x18] sm:$0x1]
        %v621 = vld [vmem:[%s288 + $0x28] sm:$0x1]
        %v622 = vld [vmem:[%s288 + $0x38] sm:$0x1]
        %v623 = vld [vmem:[%s288 + $0x48] sm:$0x1]
        %v624 = vld [vmem:[%s288 + $0x58] sm:$0x1]
        %v625 = vld [vmem:[%s288 + $0x68] sm:$0x1]
        %v626 = vld [vmem:[%s288 + $0x78] sm:$0x1]
        %v635 = vrot.slane %v620, 7
        %v636 = vsel %vm347, %v635, %v619
        %v637 = vrot.slane %v621, 6
        %v638 = vsel %vm350, %v637, %v636
        %v639 = vrot.slane %v622, 5
        %v640 = vsel %vm353, %v639, %v638
        %v641 = vrot.slane %v623, 4
        %v642 = vsel %vm356, %v641, %v640
        %v643 = vrot.slane %v624, 3
        %v644 = vsel %vm359, %v643, %v642
        %v645 = vrot.slane %v625, 2
        %v646 = vsel %vm362, %v645, %v644
        %v647 = vrot.slane %v626, 1
        %v648 = vsel %vm365, %v647, %v646
        %649 = vrot.lane.b32.xlu0 %v648, 35
        %v650 = vpop.permute.xlu0 %649
        %vm652 = vcmask 417048
        %653 = vst.msk [vmem:[#allocation2 + $0x8] sm:$0xff] %vm652, %v650
        %v654 = vld [vmem:[%s288 + $0x9] sm:$0x1]
        %v655 = vld [vmem:[%s288 + $0x19] sm:$0x1]
        %v656 = vld [vmem:[%s288 + $0x29] sm:$0x1]
        %v657 = vld [vmem:[%s288 + $0x39] sm:$0x1]
        %v658 = vld [vmem:[%s288 + $0x49] sm:$0x1]
        %v659 = vld [vmem:[%s288 + $0x59] sm:$0x1]
        %v660 = vld [vmem:[%s288 + $0x69] sm:$0x1]
        %v661 = vld [vmem:[%s288 + $0x79] sm:$0x1]
        %v670 = vrot.slane %v655, 7
        %v671 = vsel %vm347, %v670, %v654
        %v672 = vrot.slane %v656, 6
        %v673 = vsel %vm350, %v672, %v671
        %v674 = vrot.slane %v657, 5
        %v675 = vsel %vm353, %v674, %v673
        %v676 = vrot.slane %v658, 4
        %v677 = vsel %vm356, %v676, %v675
        %v678 = vrot.slane %v659, 3
        %v679 = vsel %vm359, %v678, %v677
        %v680 = vrot.slane %v660, 2
        %v681 = vsel %vm362, %v680, %v679
        %v682 = vrot.slane %v661, 1
        %v683 = vsel %vm365, %v682, %v681
        %684 = vrot.lane.b32.xlu0 %v683, 53
        %v685 = vpop.permute.xlu0 %684
        %vm687 = vcmask 564648
        %688 = vst.msk [vmem:[#allocation2 + $0x8] sm:$0xff] %vm687, %v685
        %v689 = vld [vmem:[%s288 + $0xa] sm:$0x1]
        %v690 = vld [vmem:[%s288 + $0x1a] sm:$0x1]
        %v691 = vld [vmem:[%s288 + $0x2a] sm:$0x1]
        %v692 = vld [vmem:[%s288 + $0x3a] sm:$0x1]
        %v693 = vld [vmem:[%s288 + $0x4a] sm:$0x1]
        %v694 = vld [vmem:[%s288 + $0x5a] sm:$0x1]
        %v695 = vld [vmem:[%s288 + $0x6a] sm:$0x1]
        %v696 = vld [vmem:[%s288 + $0x7a] sm:$0x1]
        %v705 = vrot.slane %v690, 7
        %v706 = vsel %vm347, %v705, %v689
        %v707 = vrot.slane %v691, 6
        %v708 = vsel %vm350, %v707, %v706
        %v709 = vrot.slane %v692, 5
        %v710 = vsel %vm353, %v709, %v708
        %v711 = vrot.slane %v693, 4
        %v712 = vsel %vm356, %v711, %v710
        %v713 = vrot.slane %v694, 3
        %v714 = vsel %vm359, %v713, %v712
        %v715 = vrot.slane %v695, 2
        %v716 = vsel %vm362, %v715, %v714
        %v717 = vrot.slane %v696, 1
        %v718 = vsel %vm365, %v717, %v716
        %719 = vrot.lane.b32.xlu0 %v718, 71
        %v720 = vpop.permute.xlu0 %719
        %vm722 = vcmask 712248
        %723 = vst.msk [vmem:[#allocation2 + $0x8] sm:$0xff] %vm722, %v720
        %v724 = vld [vmem:[%s288 + $0xb] sm:$0x1]
        %v725 = vld [vmem:[%s288 + $0x1b] sm:$0x1]
        %v726 = vld [vmem:[%s288 + $0x2b] sm:$0x1]
        %v727 = vld [vmem:[%s288 + $0x3b] sm:$0x1]
        %v728 = vld [vmem:[%s288 + $0x4b] sm:$0x1]
        %v729 = vld [vmem:[%s288 + $0x5b] sm:$0x1]
        %v730 = vld [vmem:[%s288 + $0x6b] sm:$0x1]
        %v731 = vld [vmem:[%s288 + $0x7b] sm:$0x1]
        %v740 = vrot.slane %v725, 7
        %v741 = vsel %vm347, %v740, %v724
        %v742 = vrot.slane %v726, 6
        %v743 = vsel %vm350, %v742, %v741
        %v744 = vrot.slane %v727, 5
        %v745 = vsel %vm353, %v744, %v743
        %v746 = vrot.slane %v728, 4
        %v747 = vsel %vm356, %v746, %v745
        %v748 = vrot.slane %v729, 3
        %v749 = vsel %vm359, %v748, %v747
        %v750 = vrot.slane %v730, 2
        %v751 = vsel %vm362, %v750, %v749
        %v752 = vrot.slane %v731, 1
        %v753 = vsel %vm365, %v752, %v751
        %754 = vrot.lane.b32.xlu0 %v753, 89
        %v755 = vpop.permute.xlu0 %754
        %vm757 = vcmask 859848
        %758 = vst.msk [vmem:[#allocation2 + $0x8] sm:$0xff] %vm757, %v755
        %v759 = vld [vmem:[%s288 + $0xc] sm:$0x1]
        %v760 = vld [vmem:[%s288 + $0x1c] sm:$0x1]
        %v761 = vld [vmem:[%s288 + $0x2c] sm:$0x1]
        %v762 = vld [vmem:[%s288 + $0x3c] sm:$0x1]
        %v763 = vld [vmem:[%s288 + $0x4c] sm:$0x1]
        %v764 = vld [vmem:[%s288 + $0x5c] sm:$0x1]
        %v765 = vld [vmem:[%s288 + $0x6c] sm:$0x1]
        %v766 = vld [vmem:[%s288 + $0x7c] sm:$0x1]
        %v775 = vrot.slane %v760, 7
        %v776 = vsel %vm347, %v775, %v759
        %v777 = vrot.slane %v761, 6
        %v778 = vsel %vm350, %v777, %v776
        %v779 = vrot.slane %v762, 5
        %v780 = vsel %vm353, %v779, %v778
        %v781 = vrot.slane %v763, 4
        %v782 = vsel %vm356, %v781, %v780
        %v783 = vrot.slane %v764, 3
        %v784 = vsel %vm359, %v783, %v782
        %v785 = vrot.slane %v765, 2
        %v786 = vsel %vm362, %v785, %v784
        %v787 = vrot.slane %v766, 1
        %v788 = vsel %vm365, %v787, %v786
        %789 = vrot.lane.b32.xlu0 %v788, 107
        %v790 = vpop.permute.xlu0 %789
        %vm792 = vcmask 1007448
        %793 = vst.msk [vmem:[#allocation2 + $0x8] sm:$0xff] %vm792, %v790
        %v794 = vld [vmem:[%s288 + $0xd] sm:$0x1]
        %v795 = vld [vmem:[%s288 + $0x1d] sm:$0x1]
        %v796 = vld [vmem:[%s288 + $0x2d] sm:$0x1]
        %v797 = vld [vmem:[%s288 + $0x3d] sm:$0x1]
        %v798 = vld [vmem:[%s288 + $0x4d] sm:$0x1]
        %v799 = vld [vmem:[%s288 + $0x5d] sm:$0x1]
        %v800 = vld [vmem:[%s288 + $0x6d] sm:$0x1]
        %v801 = vld [vmem:[%s288 + $0x7d] sm:$0x1]
        %v810 = vrot.slane %v795, 7
        %v811 = vsel %vm347, %v810, %v794
        %v812 = vrot.slane %v796, 6
        %v813 = vsel %vm350, %v812, %v811
        %v814 = vrot.slane %v797, 5
        %v815 = vsel %vm353, %v814, %v813
        %v816 = vrot.slane %v798, 4
        %v817 = vsel %vm356, %v816, %v815
        %v818 = vrot.slane %v799, 3
        %v819 = vsel %vm359, %v818, %v817
        %v820 = vrot.slane %v800, 2
        %v821 = vsel %vm362, %v820, %v819
        %v822 = vrot.slane %v801, 1
        %v823 = vsel %vm365, %v822, %v821
        %824 = vrot.lane.b32.xlu0 %v823, 125
        %v825 = vpop.permute.xlu0 %824
        %vm827 = vcmask 1048552
        %828 = vst.msk [vmem:[#allocation2 + $0x8] sm:$0xff] %vm827, %v825
        %vm829 = vcmask 105472
        %830 = vst.msk [vmem:[#allocation2 + $0x10] sm:$0xff] %vm829, %v825
        %v831 = vld [vmem:[%s288 + $0xe] sm:$0x1]
        %v832 = vld [vmem:[%s288 + $0x1e] sm:$0x1]
        %v833 = vld [vmem:[%s288 + $0x2e] sm:$0x1]
        %v834 = vld [vmem:[%s288 + $0x3e] sm:$0x1]
        %v835 = vld [vmem:[%s288 + $0x4e] sm:$0x1]
        %v836 = vld [vmem:[%s288 + $0x5e] sm:$0x1]
        %v837 = vld [vmem:[%s288 + $0x6e] sm:$0x1]
        %v838 = vld [vmem:[%s288 + $0x7e] sm:$0x1]
        %v847 = vrot.slane %v832, 7
        %v848 = vsel %vm347, %v847, %v831
        %v849 = vrot.slane %v833, 6
        %v850 = vsel %vm350, %v849, %v848
        %v851 = vrot.slane %v834, 5
        %v852 = vsel %vm353, %v851, %v850
        %v853 = vrot.slane %v835, 4
        %v854 = vsel %vm356, %v853, %v852
        %v855 = vrot.slane %v836, 3
        %v856 = vsel %vm359, %v855, %v854
        %v857 = vrot.slane %v837, 2
        %v858 = vsel %vm362, %v857, %v856
        %v859 = vrot.slane %v838, 1
        %v860 = vsel %vm365, %v859, %v858
        %861 = vrot.lane.b32.xlu0 %v860, 15
        %v862 = vpop.permute.xlu0 %861
        %vm864 = vcmask 253048
        %865 = vst.msk [vmem:[#allocation2 + $0x10] sm:$0xff] %vm864, %v862
        %v866 = vld [vmem:[%s288 + $0xf] sm:$0x1]
        %v867 = vld [vmem:[%s288 + $0x1f] sm:$0x1]
        %v868 = vld [vmem:[%s288 + $0x2f] sm:$0x1]
        %v869 = vld [vmem:[%s288 + $0x3f] sm:$0x1]
        %v870 = vld [vmem:[%s288 + $0x4f] sm:$0x1]
        %v871 = vld [vmem:[%s288 + $0x5f] sm:$0x1]
        %v872 = vld [vmem:[%s288 + $0x6f] sm:$0x1]
        %v873 = vld [vmem:[%s288 + $0x7f] sm:$0x1]
        %v882 = vrot.slane %v867, 7
        %v883 = vsel %vm347, %v882, %v866
        %v884 = vrot.slane %v868, 6
        %v885 = vsel %vm350, %v884, %v883
        %v886 = vrot.slane %v869, 5
        %v887 = vsel %vm353, %v886, %v885
        %v888 = vrot.slane %v870, 4
        %v889 = vsel %vm356, %v888, %v887
        %v890 = vrot.slane %v871, 3
        %v891 = vsel %vm359, %v890, %v889
        %v892 = vrot.slane %v872, 2
        %v893 = vsel %vm362, %v892, %v891
        %v894 = vrot.slane %v873, 1
        %v895 = vsel %vm365, %v894, %v893
        %896 = vrot.lane.b32.xlu0 %v895, 33
        %v897 = vpop.permute.xlu0 %896
        %vm899 = vcmask 400648
        %900 = vst.msk [vmem:[#allocation2 + $0x10] sm:$0xff] %vm899, %v897
        %v901 = vld [vmem:[%s7] sm:$0x7]
        %v902 = vld [vmem:[#allocation2] sm:$0xff]
        %v903 = vld [vmem:[#allocation2 + $0x8] sm:$0xff]
        %v904 = vld [vmem:[#allocation2 + $0x10] sm:$0xff]
        %905 = vst [vmem:[#allocation4] sm:$0xff] %v902
        %906 = vst [vmem:[#allocation4 + $0x8] sm:$0xff] %v903
        %vm907 = vcmask 261120
        %908 = vst.msk [vmem:[#allocation4 + $0x10] sm:$0xff] %vm907, %v904
        %v909 = vld [vmem:[#allocation2] sm:$0xff]
        %v910 = vld [vmem:[#allocation2 + $0x8] sm:$0xff]
        %v911 = vld [vmem:[#allocation2 + $0x10] sm:$0xff]
        %915 = vrot.lane.b32.xlu0 %v909, 127
        %v916 = vpop.permute.xlu0 %915
        %917 = vrot.lane.b32.xlu0 %v910, 127
        %v918 = vpop.permute.xlu0 %917
        %919 = vrot.lane.b32.xlu0 %v911, 127
        %v920 = vpop.permute.xlu0 %919
        %vm921 = vcmask 1039360
        %v922 = vsel %vm921, %v916, %v918
        %v923 = vsel %vm921, %v918, %v920
        %927 = vst [vmem:[#allocation4 + $0x18] sm:$0xff] %v922
        %928 = vst [vmem:[#allocation4 + $0x20] sm:$0xff] %v923
        %929 = vst.msk [vmem:[#allocation4 + $0x28] sm:$0xff] %vm907, %v920
        %v930 = vld [vmem:[#allocation2] sm:$0xff]
        %v931 = vld [vmem:[#allocation2 + $0x8] sm:$0xff]
        %v932 = vld [vmem:[#allocation2 + $0x10] sm:$0xff]
        %936 = vrot.lane.b32.xlu0 %v930, 126
        %v937 = vpop.permute.xlu0 %936
        %938 = vrot.lane.b32.xlu0 %v931, 126
        %v939 = vpop.permute.xlu0 %938
        %940 = vrot.lane.b32.xlu0 %v932, 126
        %v941 = vpop.permute.xlu0 %940
        %vm942 = vcmask 1031168
        %v943 = vsel %vm942, %v937, %v939
        %v944 = vsel %vm942, %v939, %v941
        %948 = vst [vmem:[#allocation4 + $0x30] sm:$0xff] %v943
        %949 = vst [vmem:[#allocation4 + $0x38] sm:$0xff] %v944
        %950 = vst.msk [vmem:[#allocation4 + $0x40] sm:$0xff] %vm907, %v941
        %v951 = vld [vmem:[#allocation2] sm:$0xff]
        %v952 = vld [vmem:[#allocation2 + $0x8] sm:$0xff]
        %v953 = vld [vmem:[#allocation2 + $0x10] sm:$0xff]
        %957 = vrot.lane.b32.xlu0 %v951, 110
        %v958 = vpop.permute.xlu0 %957
        %959 = vrot.lane.b32.xlu0 %v952, 110
        %v960 = vpop.permute.xlu0 %959
        %961 = vrot.lane.b32.xlu0 %v953, 110
        %v962 = vpop.permute.xlu0 %961
        %vm963 = vcmask 900096
        %v964 = vsel %vm963, %v958, %v960
        %v965 = vsel %vm963, %v960, %v962
        %969 = vst [vmem:[#allocation4 + $0x48] sm:$0xff] %v964
        %970 = vst [vmem:[#allocation4 + $0x50] sm:$0xff] %v965
        %971 = vst.msk [vmem:[#allocation4 + $0x58] sm:$0xff] %vm907, %v962
        %v972 = vld [vmem:[#allocation2] sm:$0xff]
        %v973 = vld [vmem:[#allocation2 + $0x8] sm:$0xff]
        %v974 = vld [vmem:[#allocation2 + $0x10] sm:$0xff]
        %978 = vrot.lane.b32.xlu0 %v972, 109
        %v979 = vpop.permute.xlu0 %978
        %980 = vrot.lane.b32.xlu0 %v973, 109
        %v981 = vpop.permute.xlu0 %980
        %982 = vrot.lane.b32.xlu0 %v974, 109
        %v983 = vpop.permute.xlu0 %982
        %vm984 = vcmask 891904
        %v985 = vsel %vm984, %v979, %v981
        %v986 = vsel %vm984, %v981, %v983
        %990 = vst [vmem:[#allocation4 + $0x60] sm:$0xff] %v985
        %991 = vst [vmem:[#allocation4 + $0x68] sm:$0xff] %v986
        %992 = vst.msk [vmem:[#allocation4 + $0x70] sm:$0xff] %vm907, %v983
        %v993 = vld [vmem:[#allocation2] sm:$0xff]
        %v994 = vld [vmem:[#allocation2 + $0x8] sm:$0xff]
        %v995 = vld [vmem:[#allocation2 + $0x10] sm:$0xff]
        %999 = vrot.lane.b32.xlu0 %v993, 108
        %v1000 = vpop.permute.xlu0 %999
        %1001 = vrot.lane.b32.xlu0 %v994, 108
        %v1002 = vpop.permute.xlu0 %1001
        %1003 = vrot.lane.b32.xlu0 %v995, 108
        %v1004 = vpop.permute.xlu0 %1003
        %vm1005 = vcmask 883712
        %v1006 = vsel %vm1005, %v1000, %v1002
        %v1007 = vsel %vm1005, %v1002, %v1004
        %1011 = vst [vmem:[#allocation4 + $0x78] sm:$0xff] %v1006
        %1012 = vst [vmem:[#allocation4 + $0x80] sm:$0xff] %v1007
        %1013 = vst.msk [vmem:[#allocation4 + $0x88] sm:$0xff] %vm907, %v1004
        %v1014 = vld [vmem:[#allocation2] sm:$0xff]
        %v1015 = vld [vmem:[#allocation2 + $0x8] sm:$0xff]
        %v1016 = vld [vmem:[#allocation2 + $0x10] sm:$0xff]
        %1020 = vrot.lane.b32.xlu0 %v1014, 92
        %v1021 = vpop.permute.xlu0 %1020
        %1022 = vrot.lane.b32.xlu0 %v1015, 92
        %v1023 = vpop.permute.xlu0 %1022
        %1024 = vrot.lane.b32.xlu0 %v1016, 92
        %v1025 = vpop.permute.xlu0 %1024
        %vm1026 = vcmask 752640
        %v1027 = vsel %vm1026, %v1021, %v1023
        %v1028 = vsel %vm1026, %v1023, %v1025
        %1032 = vst [vmem:[#allocation4 + $0x90] sm:$0xff] %v1027
        %1033 = vst [vmem:[#allocation4 + $0x98] sm:$0xff] %v1028
        %1034 = vst.msk [vmem:[#allocation4 + $0xa0] sm:$0xff] %vm907, %v1025
        %v1035 = vld [vmem:[#allocation2] sm:$0xff]
        %v1036 = vld [vmem:[#allocation2 + $0x8] sm:$0xff]
        %v1037 = vld [vmem:[#allocation2 + $0x10] sm:$0xff]
        %1041 = vrot.lane.b32.xlu0 %v1035, 91
        %v1042 = vpop.permute.xlu0 %1041
        %1043 = vrot.lane.b32.xlu0 %v1036, 91
        %v1044 = vpop.permute.xlu0 %1043
        %1045 = vrot.lane.b32.xlu0 %v1037, 91
        %v1046 = vpop.permute.xlu0 %1045
        %vm1047 = vcmask 744448
        %v1048 = vsel %vm1047, %v1042, %v1044
        %v1049 = vsel %vm1047, %v1044, %v1046
        %1053 = vst [vmem:[#allocation4 + $0xa8] sm:$0xff] %v1048
        %1054 = vst [vmem:[#allocation4 + $0xb0] sm:$0xff] %v1049
        %1055 = vst.msk [vmem:[#allocation4 + $0xb8] sm:$0xff] %vm907, %v1046
        %v1056 = vld [vmem:[#allocation2] sm:$0xff]
        %v1057 = vld [vmem:[#allocation2 + $0x8] sm:$0xff]
        %v1058 = vld [vmem:[#allocation2 + $0x10] sm:$0xff]
        %1062 = vrot.lane.b32.xlu0 %v1056, 90
        %v1063 = vpop.permute.xlu0 %1062
        %1064 = vrot.lane.b32.xlu0 %v1057, 90
        %v1065 = vpop.permute.xlu0 %1064
        %1066 = vrot.lane.b32.xlu0 %v1058, 90
        %v1067 = vpop.permute.xlu0 %1066
        %vm1068 = vcmask 736256
        %v1069 = vsel %vm1068, %v1063, %v1065
        %v1070 = vsel %vm1068, %v1065, %v1067
        %1074 = vst [vmem:[#allocation4 + $0xc0] sm:$0xff] %v1069
        %1075 = vst [vmem:[#allocation4 + $0xc8] sm:$0xff] %v1070
        %1076 = vst.msk [vmem:[#allocation4 + $0xd0] sm:$0xff] %vm907, %v1067
        %v1077 = vld [vmem:[%s1] sm:$0xff]
        %v1078 = vld [vmem:[#allocation4] sm:$0xff]
        %v1079 = vld [vmem:[#allocation4 + $0x8] sm:$0xff]
        %v1080 = vld [vmem:[#allocation4 + $0x10] sm:$0xff]
        %v1081 = vld [vmem:[#allocation4 + $0x18] sm:$0xff]
        %v1082 = vld [vmem:[#allocation4 + $0x20] sm:$0xff]
        %v1083 = vld [vmem:[#allocation4 + $0x28] sm:$0xff]
        %v1084 = vld [vmem:[#allocation4 + $0x30] sm:$0xff]
        %v1085 = vld [vmem:[#allocation4 + $0x38] sm:$0xff]
        %v1086 = vld [vmem:[#allocation4 + $0x40] sm:$0xff]
        %v1087 = vld [vmem:[#allocation4 + $0x48] sm:$0xff]
        %v1088 = vld [vmem:[#allocation4 + $0x50] sm:$0xff]
        %v1089 = vld [vmem:[#allocation4 + $0x58] sm:$0xff]
        %v1090 = vld [vmem:[#allocation4 + $0x60] sm:$0xff]
        %v1091 = vld [vmem:[#allocation4 + $0x68] sm:$0xff]
        %v1092 = vld [vmem:[#allocation4 + $0x70] sm:$0xff]
        %v1093 = vld [vmem:[#allocation4 + $0x78] sm:$0xff]
        %v1094 = vld [vmem:[#allocation4 + $0x80] sm:$0xff]
        %v1095 = vld [vmem:[#allocation4 + $0x88] sm:$0xff]
        %v1096 = vld [vmem:[#allocation4 + $0x90] sm:$0xff]
        %v1097 = vld [vmem:[#allocation4 + $0x98] sm:$0xff]
        %v1098 = vld [vmem:[#allocation4 + $0xa0] sm:$0xff]
        %v1099 = vld [vmem:[#allocation4 + $0xa8] sm:$0xff]
        %v1100 = vld [vmem:[#allocation4 + $0xb0] sm:$0xff]
        %v1101 = vld [vmem:[#allocation4 + $0xb8] sm:$0xff]
        %v1102 = vld [vmem:[#allocation4 + $0xc0] sm:$0xff]
        %v1103 = vld [vmem:[#allocation4 + $0xc8] sm:$0xff]
        %v1104 = vld [vmem:[#allocation4 + $0xd0] sm:$0xff]
        %vm1105 = vcmask 588800
        %v1107 = vsel %vm1105, %v1077, 0
        %1109 = vmatprep.subr.mxu0 %v1079
        %1110 = vmatpush1.msra.mxu0 %v1078
        %1111 = vmatprep.subr.mxu0 %v1082
        %1112 = vmatpush1.msra.mxu0 %v1081
        %1113 = vmatprep.subr.mxu0 %v1085
        %1114 = vmatpush1.msra.mxu0 %v1084
        %1115 = vmatprep.subr.mxu0 %v1088
        %1116 = vmatpush1.msra.mxu0 %v1087
        %1117 = vmatprep.subr.mxu0 %v1091
        %1118 = vmatpush1.msra.mxu0 %v1090
        %1119 = vmatprep.subr.mxu0 %v1094
        %1120 = vmatpush1.msra.mxu0 %v1093
        %1121 = vmatprep.subr.mxu0 %v1097
        %1122 = vmatpush1.msra.mxu0 %v1096
        %1123 = vmatprep.subr.mxu0 %v1100
        %1124 = vmatpush1.msra.mxu0 %v1099
        %1125 = vmatprep.subr.mxu0 %v1103
        %1126 = vmatpush1.msra.mxu0 %v1102
        %1127 = vmatprep.subr.mxu0 0.0
        %1128 = vmatpush1.msra.mxu0 0.0
        %1129 = vmatprep.subr.mxu0 0.0
        %1130 = vmatpush1.msra.mxu0 0.0
        %1131 = vmatprep.subr.mxu0 0.0
        %1132 = vmatpush1.msra.mxu0 0.0
        %1133 = vmatprep.subr.mxu0 0.0
        %1134 = vmatpush1.msra.mxu0 0.0
        %1135 = vmatprep.subr.mxu0 0.0
        %1136 = vmatpush1.msra.mxu0 0.0
        %1137 = vmatprep.subr.mxu0 0.0
        %1138 = vmatpush1.msra.mxu0 0.0
        %1139 = vmatprep.subr.mxu0 0.0
        %1140 = vmatpush1.msra.mxu0 0.0
        %1141 = vmatprep.subr.mxu0 0.0
        %1142 = vmatpush1.msra.mxu0 0.0
        %1143 = vmatprep.subr.mxu0 0.0
        %1144 = vmatpush1.msra.mxu0 0.0
        %1145 = vmatprep.subr.mxu0 0.0
        %1146 = vmatpush1.msra.mxu0 0.0
        %1147 = vmatprep.subr.mxu0 0.0
        %1148 = vmatpush1.msra.mxu0 0.0
        %1149 = vmatprep.subr.mxu0 0.0
        %1150 = vmatpush1.msra.mxu0 0.0
        %1151 = vmatprep.subr.mxu0 0.0
        %1152 = vmatpush1.msra.mxu0 0.0
        %1153 = vmatprep.subr.mxu0 0.0
        %1154 = vmatpush1.msra.mxu0 0.0
        %1155 = vmatprep.subr.mxu0 0.0
        %1156 = vmatpush1.msra.mxu0 0.0
        %1157 = vmatprep.subr.mxu0 0.0
        %1158 = vmatpush1.msra.mxu0 0.0
        %1159 = vmatprep.subr.mxu0 0.0
        %1160 = vmatpush1.msra.mxu0 0.0
        %1161 = vmatprep.subr.mxu0 0.0
        %1162 = vmatpush1.msra.mxu0 0.0
        %1163 = vmatprep.subr.mxu0 0.0
        %1164 = vmatpush1.msra.mxu0 0.0
        %1165 = vmatprep.subr.mxu0 0.0
        %1166 = vmatpush1.msra.mxu0 0.0
        %1167 = vmatprep.subr.mxu0 0.0
        %1168 = vmatpush1.msra.mxu0 0.0
        %1169 = vmatprep.subr.mxu0 0.0
        %1170 = vmatpush1.msra.mxu0 0.0
        %1171 = vmatprep.subr.mxu0 0.0
        %1172 = vmatpush1.msra.mxu0 0.0
        %1173 = vmatprep.mubr.f32.mxu0 0.0
        %1174 = vmatmul.mubr.f32.gmra.mrb[0].mxu0 %v1107
        %v1175 = vpop.f32.mrb[0].mxu0
        %v1176 = vadd.f32 0.0, %v1175
        %v1177 = vpop.f32.mrb[0].mxu0
        %v1178 = vadd.f32 0.0, %v1177
        %1179 = vdwg.mxu0
        %1180 = vmatprep.subr.mxu0 0.0
        %1181 = vmatpush1.msra.mxu0 %v1080
        %1182 = vmatprep.subr.mxu0 0.0
        %1183 = vmatpush1.msra.mxu0 %v1083
        %1184 = vmatprep.subr.mxu0 0.0
        %1185 = vmatpush1.msra.mxu0 %v1086
        %1186 = vmatprep.subr.mxu0 0.0
        %1187 = vmatpush1.msra.mxu0 %v1089
        %1188 = vmatprep.subr.mxu0 0.0
        %1189 = vmatpush1.msra.mxu0 %v1092
        %1190 = vmatprep.subr.mxu0 0.0
        %1191 = vmatpush1.msra.mxu0 %v1095
        %1192 = vmatprep.subr.mxu0 0.0
        %1193 = vmatpush1.msra.mxu0 %v1098
        %1194 = vmatprep.subr.mxu0 0.0
        %1195 = vmatpush1.msra.mxu0 %v1101
        %1196 = vmatprep.subr.mxu0 0.0
        %1197 = vmatpush1.msra.mxu0 %v1104
        %1198 = vmatprep.subr.mxu0 0.0
        %1199 = vmatpush1.msra.mxu0 0.0
        %1200 = vmatprep.subr.mxu0 0.0
        %1201 = vmatpush1.msra.mxu0 0.0
        %1202 = vmatprep.subr.mxu0 0.0
        %1203 = vmatpush1.msra.mxu0 0.0
        %1204 = vmatprep.subr.mxu0 0.0
        %1205 = vmatpush1.msra.mxu0 0.0
        %1206 = vmatprep.subr.mxu0 0.0
        %1207 = vmatpush1.msra.mxu0 0.0
        %1208 = vmatprep.subr.mxu0 0.0
        %1209 = vmatpush1.msra.mxu0 0.0
        %1210 = vmatprep.subr.mxu0 0.0
        %1211 = vmatpush1.msra.mxu0 0.0
        %1212 = vmatprep.subr.mxu0 0.0
        %1213 = vmatpush1.msra.mxu0 0.0
        %1214 = vmatprep.subr.mxu0 0.0
        %1215 = vmatpush1.msra.mxu0 0.0
        %1216 = vmatprep.subr.mxu0 0.0
        %1217 = vmatpush1.msra.mxu0 0.0
        %1218 = vmatprep.subr.mxu0 0.0
        %1219 = vmatpush1.msra.mxu0 0.0
        %1220 = vmatprep.subr.mxu0 0.0
        %1221 = vmatpush1.msra.mxu0 0.0
        %1222 = vmatprep.subr.mxu0 0.0
        %1223 = vmatpush1.msra.mxu0 0.0
        %1224 = vmatprep.subr.mxu0 0.0
        %1225 = vmatpush1.msra.mxu0 0.0
        %1226 = vmatprep.subr.mxu0 0.0
        %1227 = vmatpush1.msra.mxu0 0.0
        %1228 = vmatprep.subr.mxu0 0.0
        %1229 = vmatpush1.msra.mxu0 0.0
        %1230 = vmatprep.subr.mxu0 0.0
        %1231 = vmatpush1.msra.mxu0 0.0
        %1232 = vmatprep.subr.mxu0 0.0
        %1233 = vmatpush1.msra.mxu0 0.0
        %1234 = vmatprep.subr.mxu0 0.0
        %1235 = vmatpush1.msra.mxu0 0.0
        %1236 = vmatprep.subr.mxu0 0.0
        %1237 = vmatpush1.msra.mxu0 0.0
        %1238 = vmatprep.subr.mxu0 0.0
        %1239 = vmatpush1.msra.mxu0 0.0
        %1240 = vmatprep.subr.mxu0 0.0
        %1241 = vmatpush1.msra.mxu0 0.0
        %1242 = vmatprep.subr.mxu0 0.0
        %1243 = vmatpush1.msra.mxu0 0.0
        %1244 = vmatprep.mubr.f32.mxu0 0.0
        %1245 = vmatmul.mubr.f32.gmra.mrb[0].mxu0 %v1107
        %v1246 = vpop.f32.mrb[0].mxu0
        %v1247 = vadd.f32 0.0, %v1246
        %v1248 = vpop.f32.mrb[0].mxu0
        %1249 = vdwg.mxu0
        %v1250 = vld [vmem:[%s3] sm:$0xff]
        %1252 = vset.pattern.permute.xlu0 0
        %1253 = vperm.xlu0 %1252, %v1250
        %v1254 = vpop.permute.xlu0 %1253
        %v1256 = vmul.f32 %v1176, %v1254
        %v1257 = vmul.f32 %v1178, %v1254
        %v1258 = vmul.f32 %v1247, %v1254
        %v1259 = vld [vmem:[%s4] sm:$0xff]
        %1261 = vset.pattern.permute.xlu0 0
        %1262 = vperm.xlu0 %1261, %v1259
        %v1263 = vpop.permute.xlu0 %1262
        %v1265 = vadd.f32 %v1256, %v1263
        %v1266 = vadd.f32 %v1257, %v1263
        %v1267 = vadd.f32 %v1258, %v1263
        %v1268 = vmax.f32 %v1265, 0.0
        %v1269 = vmax.f32 %v1266, 0.0
        %v1270 = vmax.f32 %v1267, 0.0
        %1271 = vst [vmem:[#allocation3] sm:$0xff] 0.0
        %1272 = vst [vmem:[#allocation3 + $0x8] sm:$0xff] 0.0
        %1273 = vst.msk [vmem:[#allocation3 + $0x10] sm:$0xff] %vm328, 0.0
        %v1275 = vlaneseq
        %v1276 = vshrl.u32 %v1275, 7
        %v1277 = vsub.s32 0, %v1276
        %v1278 = vrot.slane %v901, %v1277
        %v1279 = vlaneseq
        %v1280 = vshrl.u32 %v1279, 7
        %v1281 = vsub.s32 1, %v1280
        %v1282 = vrot.slane %v901, %v1281
        %v1283 = vlaneseq
        %v1284 = vshrl.u32 %v1283, 7
        %v1285 = vsub.s32 2, %v1284
        %v1286 = vrot.slane %v901, %v1285
        %v1290 = vmul.f32 %v1268, %v1278
        %v1291 = vmul.f32 %v1269, %v1282
        %v1292 = vmul.f32 %v1270, %v1286
        %1296 = vrot.lane.b32.xlu0 %v1290, 19
        %v1297 = vpop.permute.xlu0 %1296
        %1298 = vrot.lane.b32.xlu0 %v1291, 19
        %v1299 = vpop.permute.xlu0 %1298
        %1300 = vrot.lane.b32.xlu0 %v1292, 19
        %v1301 = vpop.permute.xlu0 %1300
        %vm1302 = vcmask 154624
        %v1303 = vsel %vm1302, %v1297, %v1299
        %v1304 = vsel %vm1302, %v1299, %v1301
        %vm1308 = vcmask 1047704
        %1309 = vst.msk [vmem:[#allocation3] sm:$0xff] %vm1308, %v1297
        %1310 = vst [vmem:[#allocation3 + $0x8] sm:$0xff] %v1303
        %vm1311 = vcmask 416768
        %1312 = vst.msk [vmem:[#allocation3 + $0x10] sm:$0xff] %vm1311, %v1304
        %v1313 = vld [vmem:[#allocation3] sm:$0xff]
        %v1314 = vld [vmem:[#allocation3 + $0x8] sm:$0xff]
        %v1315 = vld [vmem:[#allocation3 + $0x10] sm:$0xff]
        %1316 = vst [vmem:[#allocation4] sm:$0xff] %v1313
        %1317 = vst [vmem:[#allocation4 + $0x8] sm:$0xff] %v1314
        %1318 = vst.msk [vmem:[#allocation4 + $0x10] sm:$0xff] %vm907, %v1315
        %v1319 = vld [vmem:[#allocation3] sm:$0xff]
        %v1320 = vld [vmem:[#allocation3 + $0x8] sm:$0xff]
        %v1321 = vld [vmem:[#allocation3 + $0x10] sm:$0xff]
        %1325 = vrot.lane.b32.xlu0 %v1319, 127
        %v1326 = vpop.permute.xlu0 %1325
        %1327 = vrot.lane.b32.xlu0 %v1320, 127
        %v1328 = vpop.permute.xlu0 %1327
        %1329 = vrot.lane.b32.xlu0 %v1321, 127
        %v1330 = vpop.permute.xlu0 %1329
        %v1331 = vsel %vm921, %v1326, %v1328
        %v1332 = vsel %vm921, %v1328, %v1330
        %1336 = vst [vmem:[#allocation4 + $0x18] sm:$0xff] %v1331
        %1337 = vst [vmem:[#allocation4 + $0x20] sm:$0xff] %v1332
        %1338 = vst.msk [vmem:[#allocation4 + $0x28] sm:$0xff] %vm907, %v1330
        %v1339 = vld [vmem:[#allocation3] sm:$0xff]
        %v1340 = vld [vmem:[#allocation3 + $0x8] sm:$0xff]
        %v1341 = vld [vmem:[#allocation3 + $0x10] sm:$0xff]
        %1345 = vrot.lane.b32.xlu0 %v1339, 126
        %v1346 = vpop.permute.xlu0 %1345
        %1347 = vrot.lane.b32.xlu0 %v1340, 126
        %v1348 = vpop.permute.xlu0 %1347
        %1349 = vrot.lane.b32.xlu0 %v1341, 126
        %v1350 = vpop.permute.xlu0 %1349
        %v1351 = vsel %vm942, %v1346, %v1348
        %v1352 = vsel %vm942, %v1348, %v1350
        %1356 = vst [vmem:[#allocation4 + $0x30] sm:$0xff] %v1351
        %1357 = vst [vmem:[#allocation4 + $0x38] sm:$0xff] %v1352
        %1358 = vst.msk [vmem:[#allocation4 + $0x40] sm:$0xff] %vm907, %v1350
        %v1359 = vld [vmem:[#allocation3] sm:$0xff]
        %v1360 = vld [vmem:[#allocation3 + $0x8] sm:$0xff]
        %v1361 = vld [vmem:[#allocation3 + $0x10] sm:$0xff]
        %1365 = vrot.lane.b32.xlu0 %v1359, 110
        %v1366 = vpop.permute.xlu0 %1365
        %1367 = vrot.lane.b32.xlu0 %v1360, 110
        %v1368 = vpop.permute.xlu0 %1367
        %1369 = vrot.lane.b32.xlu0 %v1361, 110
        %v1370 = vpop.permute.xlu0 %1369
        %v1371 = vsel %vm963, %v1366, %v1368
        %v1372 = vsel %vm963, %v1368, %v1370
        %1376 = vst [vmem:[#allocation4 + $0x48] sm:$0xff] %v1371
        %1377 = vst [vmem:[#allocation4 + $0x50] sm:$0xff] %v1372
        %1378 = vst.msk [vmem:[#allocation4 + $0x58] sm:$0xff] %vm907, %v1370
        %v1379 = vld [vmem:[#allocation3] sm:$0xff]
        %v1380 = vld [vmem:[#allocation3 + $0x8] sm:$0xff]
        %v1381 = vld [vmem:[#allocation3 + $0x10] sm:$0xff]
        %1385 = vrot.lane.b32.xlu0 %v1379, 109
        %v1386 = vpop.permute.xlu0 %1385
        %1387 = vrot.lane.b32.xlu0 %v1380, 109
        %v1388 = vpop.permute.xlu0 %1387
        %1389 = vrot.lane.b32.xlu0 %v1381, 109
        %v1390 = vpop.permute.xlu0 %1389
        %v1391 = vsel %vm984, %v1386, %v1388
        %v1392 = vsel %vm984, %v1388, %v1390
        %1396 = vst [vmem:[#allocation4 + $0x60] sm:$0xff] %v1391
        %1397 = vst [vmem:[#allocation4 + $0x68] sm:$0xff] %v1392
        %1398 = vst.msk [vmem:[#allocation4 + $0x70] sm:$0xff] %vm907, %v1390
        %v1399 = vld [vmem:[#allocation3] sm:$0xff]
        %v1400 = vld [vmem:[#allocation3 + $0x8] sm:$0xff]
        %v1401 = vld [vmem:[#allocation3 + $0x10] sm:$0xff]
        %1405 = vrot.lane.b32.xlu0 %v1399, 108
        %v1406 = vpop.permute.xlu0 %1405
        %1407 = vrot.lane.b32.xlu0 %v1400, 108
        %v1408 = vpop.permute.xlu0 %1407
        %1409 = vrot.lane.b32.xlu0 %v1401, 108
        %v1410 = vpop.permute.xlu0 %1409
        %v1411 = vsel %vm1005, %v1406, %v1408
        %v1412 = vsel %vm1005, %v1408, %v1410
        %1416 = vst [vmem:[#allocation4 + $0x78] sm:$0xff] %v1411
        %1417 = vst [vmem:[#allocation4 + $0x80] sm:$0xff] %v1412
        %1418 = vst.msk [vmem:[#allocation4 + $0x88] sm:$0xff] %vm907, %v1410
        %v1419 = vld [vmem:[#allocation3] sm:$0xff]
        %v1420 = vld [vmem:[#allocation3 + $0x8] sm:$0xff]
        %v1421 = vld [vmem:[#allocation3 + $0x10] sm:$0xff]
        %1425 = vrot.lane.b32.xlu0 %v1419, 92
        %v1426 = vpop.permute.xlu0 %1425
        %1427 = vrot.lane.b32.xlu0 %v1420, 92
        %v1428 = vpop.permute.xlu0 %1427
        %1429 = vrot.lane.b32.xlu0 %v1421, 92
        %v1430 = vpop.permute.xlu0 %1429
        %v1431 = vsel %vm1026, %v1426, %v1428
        %v1432 = vsel %vm1026, %v1428, %v1430
        %1436 = vst [vmem:[#allocation4 + $0x90] sm:$0xff] %v1431
        %1437 = vst [vmem:[#allocation4 + $0x98] sm:$0xff] %v1432
        %1438 = vst.msk [vmem:[#allocation4 + $0xa0] sm:$0xff] %vm907, %v1430
        %v1439 = vld [vmem:[#allocation3] sm:$0xff]
        %v1440 = vld [vmem:[#allocation3 + $0x8] sm:$0xff]
        %v1441 = vld [vmem:[#allocation3 + $0x10] sm:$0xff]
        %1445 = vrot.lane.b32.xlu0 %v1439, 91
        %v1446 = vpop.permute.xlu0 %1445
        %1447 = vrot.lane.b32.xlu0 %v1440, 91
        %v1448 = vpop.permute.xlu0 %1447
        %1449 = vrot.lane.b32.xlu0 %v1441, 91
        %v1450 = vpop.permute.xlu0 %1449
        %v1451 = vsel %vm1047, %v1446, %v1448
        %v1452 = vsel %vm1047, %v1448, %v1450
        %1456 = vst [vmem:[#allocation4 + $0xa8] sm:$0xff] %v1451
        %1457 = vst [vmem:[#allocation4 + $0xb0] sm:$0xff] %v1452
        %1458 = vst.msk [vmem:[#allocation4 + $0xb8] sm:$0xff] %vm907, %v1450
        %v1459 = vld [vmem:[#allocation3] sm:$0xff]
        %v1460 = vld [vmem:[#allocation3 + $0x8] sm:$0xff]
        %v1461 = vld [vmem:[#allocation3 + $0x10] sm:$0xff]
        %1465 = vrot.lane.b32.xlu0 %v1459, 90
        %v1466 = vpop.permute.xlu0 %1465
        %1467 = vrot.lane.b32.xlu0 %v1460, 90
        %v1468 = vpop.permute.xlu0 %1467
        %1469 = vrot.lane.b32.xlu0 %v1461, 90
        %v1470 = vpop.permute.xlu0 %1469
        %v1471 = vsel %vm1068, %v1466, %v1468
        %v1472 = vsel %vm1068, %v1468, %v1470
        %1476 = vst [vmem:[#allocation4 + $0xc0] sm:$0xff] %v1471
        %1477 = vst [vmem:[#allocation4 + $0xc8] sm:$0xff] %v1472
        %1478 = vst.msk [vmem:[#allocation4 + $0xd0] sm:$0xff] %vm907, %v1470
        %v1479 = vld [vmem:[%s2] sm:$0xff]
        %v1480 = vld [vmem:[#allocation4] sm:$0xff]
        %v1481 = vld [vmem:[#allocation4 + $0x8] sm:$0xff]
        %v1482 = vld [vmem:[#allocation4 + $0x10] sm:$0xff]
        %v1483 = vld [vmem:[#allocation4 + $0x18] sm:$0xff]
        %v1484 = vld [vmem:[#allocation4 + $0x20] sm:$0xff]
        %v1485 = vld [vmem:[#allocation4 + $0x28] sm:$0xff]
        %v1486 = vld [vmem:[#allocation4 + $0x30] sm:$0xff]
        %v1487 = vld [vmem:[#allocation4 + $0x38] sm:$0xff]
        %v1488 = vld [vmem:[#allocation4 + $0x40] sm:$0xff]
        %v1489 = vld [vmem:[#allocation4 + $0x48] sm:$0xff]
        %v1490 = vld [vmem:[#allocation4 + $0x50] sm:$0xff]
        %v1491 = vld [vmem:[#allocation4 + $0x58] sm:$0xff]
        %v1492 = vld [vmem:[#allocation4 + $0x60] sm:$0xff]
        %v1493 = vld [vmem:[#allocation4 + $0x68] sm:$0xff]
        %v1494 = vld [vmem:[#allocation4 + $0x70] sm:$0xff]
        %v1495 = vld [vmem:[#allocation4 + $0x78] sm:$0xff]
        %v1496 = vld [vmem:[#allocation4 + $0x80] sm:$0xff]
        %v1497 = vld [vmem:[#allocation4 + $0x88] sm:$0xff]
        %v1498 = vld [vmem:[#allocation4 + $0x90] sm:$0xff]
        %v1499 = vld [vmem:[#allocation4 + $0x98] sm:$0xff]
        %v1500 = vld [vmem:[#allocation4 + $0xa0] sm:$0xff]
        %v1501 = vld [vmem:[#allocation4 + $0xa8] sm:$0xff]
        %v1502 = vld [vmem:[#allocation4 + $0xb0] sm:$0xff]
        %v1503 = vld [vmem:[#allocation4 + $0xb8] sm:$0xff]
        %v1504 = vld [vmem:[#allocation4 + $0xc0] sm:$0xff]
        %v1505 = vld [vmem:[#allocation4 + $0xc8] sm:$0xff]
        %v1506 = vld [vmem:[#allocation4 + $0xd0] sm:$0xff]
        %v1508 = vsel %vm1105, %v1479, 0
        %1510 = vmatprep.subr.mxu0 %v1481
        %1511 = vmatpush1.msra.mxu0 %v1480
        %1512 = vmatprep.subr.mxu0 %v1484
        %1513 = vmatpush1.msra.mxu0 %v1483
        %1514 = vmatprep.subr.mxu0 %v1487
        %1515 = vmatpush1.msra.mxu0 %v1486
        %1516 = vmatprep.subr.mxu0 %v1490
        %1517 = vmatpush1.msra.mxu0 %v1489
        %1518 = vmatprep.subr.mxu0 %v1493
        %1519 = vmatpush1.msra.mxu0 %v1492
        %1520 = vmatprep.subr.mxu0 %v1496
        %1521 = vmatpush1.msra.mxu0 %v1495
        %1522 = vmatprep.subr.mxu0 %v1499
        %1523 = vmatpush1.msra.mxu0 %v1498
        %1524 = vmatprep.subr.mxu0 %v1502
        %1525 = vmatpush1.msra.mxu0 %v1501
        %1526 = vmatprep.subr.mxu0 %v1505
        %1527 = vmatpush1.msra.mxu0 %v1504
        %1528 = vmatprep.subr.mxu0 0.0
        %1529 = vmatpush1.msra.mxu0 0.0
        %1530 = vmatprep.subr.mxu0 0.0
        %1531 = vmatpush1.msra.mxu0 0.0
        %1532 = vmatprep.subr.mxu0 0.0
        %1533 = vmatpush1.msra.mxu0 0.0
        %1534 = vmatprep.subr.mxu0 0.0
        %1535 = vmatpush1.msra.mxu0 0.0
        %1536 = vmatprep.subr.mxu0 0.0
        %1537 = vmatpush1.msra.mxu0 0.0
        %1538 = vmatprep.subr.mxu0 0.0
        %1539 = vmatpush1.msra.mxu0 0.0
        %1540 = vmatprep.subr.mxu0 0.0
        %1541 = vmatpush1.msra.mxu0 0.0
        %1542 = vmatprep.subr.mxu0 0.0
        %1543 = vmatpush1.msra.mxu0 0.0
        %1544 = vmatprep.subr.mxu0 0.0
        %1545 = vmatpush1.msra.mxu0 0.0
        %1546 = vmatprep.subr.mxu0 0.0
        %1547 = vmatpush1.msra.mxu0 0.0
        %1548 = vmatprep.subr.mxu0 0.0
        %1549 = vmatpush1.msra.mxu0 0.0
        %1550 = vmatprep.subr.mxu0 0.0
        %1551 = vmatpush1.msra.mxu0 0.0
        %1552 = vmatprep.subr.mxu0 0.0
        %1553 = vmatpush1.msra.mxu0 0.0
        %1554 = vmatprep.subr.mxu0 0.0
        %1555 = vmatpush1.msra.mxu0 0.0
        %1556 = vmatprep.subr.mxu0 0.0
        %1557 = vmatpush1.msra.mxu0 0.0
        %1558 = vmatprep.subr.mxu0 0.0
        %1559 = vmatpush1.msra.mxu0 0.0
        %1560 = vmatprep.subr.mxu0 0.0
        %1561 = vmatpush1.msra.mxu0 0.0
        %1562 = vmatprep.subr.mxu0 0.0
        %1563 = vmatpush1.msra.mxu0 0.0
        %1564 = vmatprep.subr.mxu0 0.0
        %1565 = vmatpush1.msra.mxu0 0.0
        %1566 = vmatprep.subr.mxu0 0.0
        %1567 = vmatpush1.msra.mxu0 0.0
        %1568 = vmatprep.subr.mxu0 0.0
        %1569 = vmatpush1.msra.mxu0 0.0
        %1570 = vmatprep.subr.mxu0 0.0
        %1571 = vmatpush1.msra.mxu0 0.0
        %1572 = vmatprep.subr.mxu0 0.0
        %1573 = vmatpush1.msra.mxu0 0.0
        %1574 = vmatprep.mubr.f32.mxu0 0.0
        %1575 = vmatmul.mubr.f32.gmra.mrb[0].mxu0 %v1508
        %v1576 = vpop.f32.mrb[0].mxu0
        %v1577 = vadd.f32 0.0, %v1576
        %v1578 = vpop.f32.mrb[0].mxu0
        %v1579 = vadd.f32 0.0, %v1578
        %1580 = vdwg.mxu0
        %1581 = vmatprep.subr.mxu0 0.0
        %1582 = vmatpush1.msra.mxu0 %v1482
        %1583 = vmatprep.subr.mxu0 0.0
        %1584 = vmatpush1.msra.mxu0 %v1485
        %1585 = vmatprep.subr.mxu0 0.0
        %1586 = vmatpush1.msra.mxu0 %v1488
        %1587 = vmatprep.subr.mxu0 0.0
        %1588 = vmatpush1.msra.mxu0 %v1491
        %1589 = vmatprep.subr.mxu0 0.0
        %1590 = vmatpush1.msra.mxu0 %v1494
        %1591 = vmatprep.subr.mxu0 0.0
        %1592 = vmatpush1.msra.mxu0 %v1497
        %1593 = vmatprep.subr.mxu0 0.0
        %1594 = vmatpush1.msra.mxu0 %v1500
        %1595 = vmatprep.subr.mxu0 0.0
        %1596 = vmatpush1.msra.mxu0 %v1503
        %1597 = vmatprep.subr.mxu0 0.0
        %1598 = vmatpush1.msra.mxu0 %v1506
        %1599 = vmatprep.subr.mxu0 0.0
        %1600 = vmatpush1.msra.mxu0 0.0
        %1601 = vmatprep.subr.mxu0 0.0
        %1602 = vmatpush1.msra.mxu0 0.0
        %1603 = vmatprep.subr.mxu0 0.0
        %1604 = vmatpush1.msra.mxu0 0.0
        %1605 = vmatprep.subr.mxu0 0.0
        %1606 = vmatpush1.msra.mxu0 0.0
        %1607 = vmatprep.subr.mxu0 0.0
        %1608 = vmatpush1.msra.mxu0 0.0
        %1609 = vmatprep.subr.mxu0 0.0
        %1610 = vmatpush1.msra.mxu0 0.0
        %1611 = vmatprep.subr.mxu0 0.0
        %1612 = vmatpush1.msra.mxu0 0.0
        %1613 = vmatprep.subr.mxu0 0.0
        %1614 = vmatpush1.msra.mxu0 0.0
        %1615 = vmatprep.subr.mxu0 0.0
        %1616 = vmatpush1.msra.mxu0 0.0
        %1617 = vmatprep.subr.mxu0 0.0
        %1618 = vmatpush1.msra.mxu0 0.0
        %1619 = vmatprep.subr.mxu0 0.0
        %1620 = vmatpush1.msra.mxu0 0.0
        %1621 = vmatprep.subr.mxu0 0.0
        %1622 = vmatpush1.msra.mxu0 0.0
        %1623 = vmatprep.subr.mxu0 0.0
        %1624 = vmatpush1.msra.mxu0 0.0
        %1625 = vmatprep.subr.mxu0 0.0
        %1626 = vmatpush1.msra.mxu0 0.0
        %1627 = vmatprep.subr.mxu0 0.0
        %1628 = vmatpush1.msra.mxu0 0.0
        %1629 = vmatprep.subr.mxu0 0.0
        %1630 = vmatpush1.msra.mxu0 0.0
        %1631 = vmatprep.subr.mxu0 0.0
        %1632 = vmatpush1.msra.mxu0 0.0
        %1633 = vmatprep.subr.mxu0 0.0
        %1634 = vmatpush1.msra.mxu0 0.0
        %1635 = vmatprep.subr.mxu0 0.0
        %1636 = vmatpush1.msra.mxu0 0.0
        %1637 = vmatprep.subr.mxu0 0.0
        %1638 = vmatpush1.msra.mxu0 0.0
        %1639 = vmatprep.subr.mxu0 0.0
        %1640 = vmatpush1.msra.mxu0 0.0
        %1641 = vmatprep.subr.mxu0 0.0
        %1642 = vmatpush1.msra.mxu0 0.0
        %1643 = vmatprep.subr.mxu0 0.0
        %1644 = vmatpush1.msra.mxu0 0.0
        %1645 = vmatprep.mubr.f32.mxu0 0.0
        %1646 = vmatmul.mubr.f32.gmra.mrb[0].mxu0 %v1508
        %v1647 = vpop.f32.mrb[0].mxu0
        %v1648 = vadd.f32 0.0, %v1647
        %v1649 = vpop.f32.mrb[0].mxu0
        %1650 = vdwg.mxu0
        %v1651 = vld [vmem:[#allocation2] sm:$0xff]
        %v1652 = vld [vmem:[#allocation2 + $0x8] sm:$0xff]
        %v1653 = vld [vmem:[#allocation2 + $0x10] sm:$0xff]
        %v1654 = vld [vmem:[%s5] sm:$0xff]
        %1656 = vset.pattern.permute.xlu0 0
        %1657 = vperm.xlu0 %1656, %v1654
        %v1658 = vpop.permute.xlu0 %1657
        %v1660 = vmul.f32 %v1577, %v1658
        %v1661 = vmul.f32 %v1579, %v1658
        %v1662 = vmul.f32 %v1648, %v1658
        %v1663 = vld [vmem:[%s6] sm:$0xff]
        %1665 = vset.pattern.permute.xlu0 0
        %1666 = vperm.xlu0 %1665, %v1663
        %v1667 = vpop.permute.xlu0 %1666
        %v1669 = vadd.f32 %v1660, %v1667
        %v1670 = vadd.f32 %v1661, %v1667
        %v1671 = vadd.f32 %v1662, %v1667
        %1675 = vrot.lane.b32.xlu0 %v1651, 109
        %v1676 = vpop.permute.xlu0 %1675
        %1677 = vrot.lane.b32.xlu0 %v1652, 109
        %v1678 = vpop.permute.xlu0 %1677
        %1679 = vrot.lane.b32.xlu0 %v1653, 109
        %v1680 = vpop.permute.xlu0 %1679
        %v1681 = vsel %vm984, %v1676, %v1678
        %v1682 = vsel %vm984, %v1678, %v1680
        %v1686 = vadd.f32 %v1669, %v1681
        %v1687 = vadd.f32 %v1670, %v1682
        %v1688 = vadd.f32 %v1671, %v1680
        %v1689 = vmax.f32 %v1686, 0.0
        %v1690 = vmax.f32 %v1687, 0.0
        %v1691 = vmax.f32 %v1688, 0.0
        %1692 = vst [vmem:[%s325] sm:$0xff] %v1689
        %1693 = vst [vmem:[%s325 + $0x8] sm:$0xff] %v1690
        %1694 = vst.msk [vmem:[%s325 + $0x10] sm:$0xff] %vm907, %v1691
        %p1695 = scmp.lt.s32.totalorder %s22, 1
        %s1696 = scalar_select %p1695, %s22, 1
        %s1697 = smul.addr %s1696, 3
        %s1698 = smul.addr %s1697, 8
        %s1699 = scalar_lea.vmem %s8, %s1698
        // Predicated region
        $region57: #{basic_block_forward.1} parent=51 // pred_check
          %p1700 = pneg %p213
        $region58: #{basic_block_forward.1} parent=51 // pred_check_branch
          %1702 = sbr.rel (%p1700) target = $region60
        $region59: #{basic_block_forward.1} parent=51 // pred_region
          _
        $region60: #{basic_block_forward.1} parent=51 // pred_fallthru
          _
      $region52: #{basic_block_forward.1} parent=5 // pred_fallthru
        _
      %p1703 = scmp.le.s32.totalorder 2, %s17
      // Predicated region
      $region61: #{basic_block_forward.1} parent=5 // pred_check
        %p1704 = pneg %p1703
      $region62: #{basic_block_forward.1} parent=5 // pred_check_branch
        %1706 = sbr.rel (%p1704) target = $region64
      $region63: #{basic_block_forward.1} parent=5 // pred_region
        %s1707 = ssub.s32 %s17, 2
        // Predicated region
        $region65: #{basic_block_forward.1} parent=63 // pred_check
          %p1708 = pneg %p219
        $region66: #{basic_block_forward.1} parent=63 // pred_check_branch
          %1710 = sbr.rel (%p1708) target = $region68
        $region67: #{basic_block_forward.1} parent=63 // pred_region
          %p1711 = scmp.lt.s32.totalorder %s23, 1
          %s1712 = scalar_select %p1711, %s23, 1
          %s1713 = smul.addr %s1712, 3
          %s1714 = smul.addr %s1713, 8
          %s1715 = scalar_lea.vmem %s8, %s1714
        $region68: #{basic_block_forward.1} parent=63 // pred_fallthru
          _
      $region64: #{basic_block_forward.1} parent=5 // pred_fallthru
        _
    $region6: #{basic_block_forward.1} parent=1 // loop_footer
      %s21 = sadd.s32 1, %s17
    $region7: #{basic_block_forward.1} parent=1 // loop_footer_branch
      %16 = sbr.rel target = $region3
    $region8: #{basic_block_forward.1} parent=1 // loop_exit
      _
    %1716 = vsyncpa [#allocation6], 1
    %s1717 = scalar_lea.sflag [#allocation6], 1
    %1718 = vsyncpa %s1717, 1

</llo_original>
